<compile_context>
chip_gen: v7x
topology: tpu7x:2x2x1
jax: 0.10.0
libtpu: 0.0.40
codegen_flags: <defaults>
</compile_context>

<pallas_src>
import math

import jax
import jax.numpy as jnp
import numpy as np
from jax.experimental import pallas as pl
from jax.experimental.pallas import tpu as pltpu

LANE = 128


def _round_up(v, m=LANE):
    return ((v + m - 1) // m) * m


def _pad2(w, rows, cols):
    out = jnp.zeros((rows, cols), jnp.float32)
    return out.at[: w.shape[0], : w.shape[1]].set(w.astype(jnp.float32))


# ---------------------------------------------------------------------------
# Pallas kernel: one grid step == `scene_block` whole scenes.
# ---------------------------------------------------------------------------
def _make_kernel(scale):
    def kernel(x_ref,
               w0_ref, b0_ref,
               w1t_ref, w1b_ref, b1_ref,
               w2t_ref, w2b_ref, b2_ref,
               wqkv_ref, wd1_ref, bd1_ref, wd2_ref, bd2_ref,
               out_ref):
        x = x_ref[...].astype(jnp.float32)            # [Bt, P, N, F]
        Bt, P, N, F = x.shape
        R = Bt * P                                     # polylines in this block
        M = R * N                                      # vectors in this block
        Hp = w0_ref.shape[1]                           # padded sub-layer width (128)
        Gp = wd1_ref.shape[0]                          # padded attention width (128)

        # ---- SubGraph (3 layers, split-weight form, all 128-lane wide) -----
        hh = jnp.maximum(
            jnp.dot(x.reshape(M, F), w0_ref[...],
                    preferred_element_type=jnp.float32) + b0_ref[...], 0.0)
        agg = jnp.max(hh.reshape(R, N, Hp), axis=1)                 # [R, Hp]

        def sub_layer(hh, agg, wt_ref, wb_ref, b_ref):
            top = jnp.dot(hh, wt_ref[...], preferred_element_type=jnp.float32)
            bot = (jnp.dot(agg, wb_ref[...],
                           preferred_element_type=jnp.float32) + b_ref[...])
            nxt = jnp.maximum(top.reshape(R, N, Hp) + bot[:, None, :], 0.0)
            return nxt.reshape(M, Hp), jnp.max(nxt, axis=1)

        hh, agg = sub_layer(hh, agg, w1t_ref, w1b_ref, b1_ref)
        _, agg = sub_layer(hh, agg, w2t_ref, w2b_ref, b2_ref)       # agg3: [R, Hp]
        # poly == concat(agg3, agg3) is already folded into wqkv.

        # ---- GlobalGraph: single-head self-attention, per scene ------------
        qkv = jnp.dot(agg, wqkv_ref[...],
                      preferred_element_type=jnp.float32)           # [R, 3*Gp]
        q = qkv[:, :Gp].reshape(Bt, P, Gp)
        k = qkv[:, Gp:2 * Gp].reshape(Bt, P, Gp)
        v = qkv[:, 2 * Gp:].reshape(Bt, P, Gp)

        s = jnp.einsum("bpg,bqg->bpq", q, k,
                       preferred_element_type=jnp.float32) * scale
        s = s - jnp.max(s, axis=-1, keepdims=True)
        e = jnp.exp(s)
        attn = e * pl.reciprocal(jnp.sum(e, axis=-1, keepdims=True), approx=True)
        gout = jnp.einsum("bpq,bqg->bpg", attn, v,
                          preferred_element_type=jnp.float32).reshape(R, Gp)

        # ---- Decoder --------------------------------------------------------
        hdec = jnp.maximum(
            jnp.dot(gout, wd1_ref[...],
                    preferred_element_type=jnp.float32) + bd1_ref[...], 0.0)
        pred = (jnp.dot(hdec, wd2_ref[...],
                        preferred_element_type=jnp.float32) + bd2_ref[...])
        out_ref[...] = pred.astype(out_ref.dtype)      # lane-dense [R, 128] store

    return kernel


# ---------------------------------------------------------------------------
# Wrapper: pad / split / fuse the weights once, launch the fused kernel.
# ---------------------------------------------------------------------------
def _prepare_params(params):
    F = params["w0"].shape[0]
    H = params["w0"].shape[1]                 # hidden per sub-layer (24)
    G = params["wq"].shape[1]                 # global_out_feature (64)
    D = params["wd1"].shape[1]                # hidden_nodes (64)
    T = params["wd2"].shape[1]                # output_horizon (32)
    Hp, Gp, Dp, Tp = (_round_up(d) for d in (H, G, D, T))

    w1, w2 = params["w1"], params["w2"]
    # concat(h, agg) @ Wq  ==  agg @ (Wq[:H] + Wq[H:])   (since poly = [agg, agg])
    wq_f = params["wq"][:H] + params["wq"][H:]
    wk_f = params["wk"][:H] + params["wk"][H:]
    wv_f = params["wv"][:H] + params["wv"][H:]

    packed = [
        _pad2(params["w0"], F, Hp), _pad2(params["b0"], 1, Hp),
        _pad2(w1[:H], Hp, Hp), _pad2(w1[H:], Hp, Hp), _pad2(params["b1"], 1, Hp),
        _pad2(w2[:H], Hp, Hp), _pad2(w2[H:], Hp, Hp), _pad2(params["b2"], 1, Hp),
        jnp.concatenate([_pad2(wq_f, Hp, Gp), _pad2(wk_f, Hp, Gp),
                         _pad2(wv_f, Hp, Gp)], axis=1),
        _pad2(params["wd1"], Gp, Dp), _pad2(params["bd1"], 1, Dp),
        _pad2(params["wd2"], Dp, Tp), _pad2(params["bd2"], 1, Tp),
    ]
    return packed, (G, T, Tp)


def vectornet_forward(x, params, *, scene_block=None):
    B, P, N, F = x.shape
    packed, (G, T, Tp) = _prepare_params(params)

    if scene_block is None:
        scene_block = B          # fuse the whole batch into one grid step
        # (set scene_block=B//2 on v7x to expose a parallel grid of 2 for dual TCs)
    assert B % scene_block == 0
    num_blocks = B // scene_block

    kernel = _make_kernel(scale=1.0 / math.sqrt(float(G)))

    in_specs = [pl.BlockSpec((scene_block, P, N, F), lambda b: (b, 0, 0, 0))]
    in_specs += [pl.BlockSpec(w.shape, lambda b: (0, 0)) for w in packed]

    out = pl.pallas_call(
        kernel,
        out_shape=jax.ShapeDtypeStruct((B * P, Tp), jnp.float32),
        grid_spec=pltpu.PrefetchScalarGridSpec(
            num_scalar_prefetch=0,
            grid=(num_blocks,),
            in_specs=in_specs,
            out_specs=pl.BlockSpec((scene_block * P, Tp), lambda b: (b, 0)),
        ),
        compiler_params=pltpu.CompilerParams(
            dimension_semantics=("parallel",)),
    )(x, *packed)

    return out[:, :T].reshape(B, P, T)


# ---------------------------------------------------------------------------
# Pure-JAX reference (original unsplit / unpadded math) for correctness check
# ---------------------------------------------------------------------------
def vectornet_ref(x, params):
    def sub_layer(h, w, b):
        hh = jnp.maximum(jnp.einsum("bpnf,fh->bpnh", h, w) + b[0], 0.0)
        agg = jnp.max(hh, axis=2, keepdims=True)
        return jnp.concatenate([hh, jnp.broadcast_to(agg, hh.shape)], axis=-1)

    h = sub_layer(x.astype(jnp.float32), params["w0"], params["b0"])
    h = sub_layer(h, params["w1"], params["b1"])
    h = sub_layer(h, params["w2"], params["b2"])
    poly = jnp.max(h, axis=2)                               # [B, P, sub_out]

    q = jnp.einsum("bpf,fg->bpg", poly, params["wq"])
    k = jnp.einsum("bpf,fg->bpg", poly, params["wk"])
    v = jnp.einsum("bpf,fg->bpg", poly, params["wv"])
    scores = jnp.einsum("bpg,bqg->bpq", q, k) / jnp.sqrt(jnp.float32(q.shape[-1]))
    attn = jax.nn.softmax(scores, axis=-1)
    gout = jnp.einsum("bpq,bqg->bpg", attn, v)

    hdec = jnp.maximum(
        jnp.einsum("bpg,gh->bph", gout, params["wd1"]) + params["bd1"][0], 0.0)
    return jnp.einsum("bph,ht->bpt", hdec, params["wd2"]) + params["bd2"][0]


# ---------------------------------------------------------------------------
if __name__ == "__main__":
    # Module defaults (scaled to small toy shapes).
    sub_in_feature = 8        # F_in
    sub_out_feature = 48      # per-polyline feature; hidden per sub-layer = 24
    global_out_feature = 64
    hidden_nodes = 64
    output_horizon = 32
    H = sub_out_feature // 2

    B, P, N = 2, 8, 8         # scenes, polylines per scene, vectors per polyline

    key = jax.random.PRNGKey(0)
    keys = jax.random.split(key, 16)

    def init(k, shape, scale=0.1):
        return (scale * jax.random.normal(k, shape)).astype(jnp.float32)

    params = {
        "w0":  init(keys[0], (sub_in_feature, H)),
        "b0":  init(keys[1], (1, H)),
        "w1":  init(keys[2], (sub_out_feature, H)),
        "b1":  init(keys[3], (1, H)),
        "w2":  init(keys[4], (sub_out_feature, H)),
        "b2":  init(keys[5], (1, H)),
        "wq":  init(keys[6], (sub_out_feature, global_out_feature)),
        "wk":  init(keys[7], (sub_out_feature, global_out_feature)),
        "wv":  init(keys[8], (sub_out_feature, global_out_feature)),
        "wd1": init(keys[9], (global_out_feature, hidden_nodes)),
        "bd1": init(keys[10], (1, hidden_nodes)),
        "wd2": init(keys[11], (hidden_nodes, output_horizon)),
        "bd2": init(keys[12], (1, output_horizon)),
    }

    x = jax.random.normal(keys[13], (B, P, N, sub_in_feature), dtype=jnp.float32)

    out = jax.block_until_ready(vectornet_forward(x, params))
    ref = jax.block_until_ready(vectornet_ref(x, params))
    np.testing.assert_allclose(np.asarray(out), np.asarray(ref),
                               rtol=5e-3, atol=5e-3)

    # TODO(synk): edge_index-driven message passing is not modeled; SubGraph
    # aggregation is max over all vectors of a polyline (VectorNet paper semantics).
    print("KERNEL_OK")
</pallas_src>

<mosaic_0001>
module attributes {stable_mosaic.version = 11 : i64} {
  func.func @kernel(%arg0: i32, %arg1: memref<2x8x8x8xf32, #tpu.memory_space<vmem>>, %arg2: memref<8x128xf32, #tpu.memory_space<vmem>>, %arg3: memref<1x128xf32, #tpu.memory_space<vmem>>, %arg4: memref<128x128xf32, #tpu.memory_space<vmem>>, %arg5: memref<128x128xf32, #tpu.memory_space<vmem>>, %arg6: memref<1x128xf32, #tpu.memory_space<vmem>>, %arg7: memref<128x128xf32, #tpu.memory_space<vmem>>, %arg8: memref<128x128xf32, #tpu.memory_space<vmem>>, %arg9: memref<1x128xf32, #tpu.memory_space<vmem>>, %arg10: memref<128x384xf32, #tpu.memory_space<vmem>>, %arg11: memref<128x128xf32, #tpu.memory_space<vmem>>, %arg12: memref<1x128xf32, #tpu.memory_space<vmem>>, %arg13: memref<128x128xf32, #tpu.memory_space<vmem>>, %arg14: memref<1x128xf32, #tpu.memory_space<vmem>>, %arg15: memref<16x128xf32, #tpu.memory_space<vmem>>) attributes {dimension_semantics = [#tpu.dimension_semantics<parallel>], iteration_bounds = array<i64: 1>, scalar_prefetch = 0 : i64, scratch_operands = 0 : i64, tpu.core_type = #tpu.core_type<tc>, window_params = [{transform_indices = @transform_0, window_bounds = array<i64: 2, 8, 8, 8>}, {pipeline_mode = #tpu.pipeline_mode<synchronous>, transform_indices = @transform_1, window_bounds = array<i64: 8, 128>}, {pipeline_mode = #tpu.pipeline_mode<synchronous>, transform_indices = @transform_2, window_bounds = array<i64: 1, 128>}, {pipeline_mode = #tpu.pipeline_mode<synchronous>, transform_indices = @transform_3, window_bounds = array<i64: 128, 128>}, {pipeline_mode = #tpu.pipeline_mode<synchronous>, transform_indices = @transform_4, window_bounds = array<i64: 128, 128>}, {pipeline_mode = #tpu.pipeline_mode<synchronous>, transform_indices = @transform_5, window_bounds = array<i64: 1, 128>}, {pipeline_mode = #tpu.pipeline_mode<synchronous>, transform_indices = @transform_6, window_bounds = array<i64: 128, 128>}, {pipeline_mode = #tpu.pipeline_mode<synchronous>, transform_indices = @transform_7, window_bounds = array<i64: 128, 128>}, {pipeline_mode = #tpu.pipeline_mode<synchronous>, transform_indices = @transform_8, window_bounds = array<i64: 1, 128>}, {pipeline_mode = #tpu.pipeline_mode<synchronous>, transform_indices = @transform_9, window_bounds = array<i64: 128, 384>}, {pipeline_mode = #tpu.pipeline_mode<synchronous>, transform_indices = @transform_10, window_bounds = array<i64: 128, 128>}, {pipeline_mode = #tpu.pipeline_mode<synchronous>, transform_indices = @transform_11, window_bounds = array<i64: 1, 128>}, {pipeline_mode = #tpu.pipeline_mode<synchronous>, transform_indices = @transform_12, window_bounds = array<i64: 128, 128>}, {pipeline_mode = #tpu.pipeline_mode<synchronous>, transform_indices = @transform_13, window_bounds = array<i64: 1, 128>}, {transform_indices = @transform_14, window_bounds = array<i64: 16, 128>}]} {
    %c0 = arith.constant 0 : index
    %c0_0 = arith.constant 0 : index
    %c0_1 = arith.constant 0 : index
    %c0_2 = arith.constant 0 : index
    %0 = vector.load %arg1[%c0, %c0_0, %c0_1, %c0_2] : memref<2x8x8x8xf32, #tpu.memory_space<vmem>>, vector<2x8x8x8xf32>
    %1 = vector.shape_cast %0 : vector<2x8x8x8xf32> to vector<128x8xf32>
    %c0_3 = arith.constant 0 : index
    %c0_4 = arith.constant 0 : index
    %2 = vector.load %arg2[%c0_3, %c0_4] : memref<8x128xf32, #tpu.memory_space<vmem>>, vector<8x128xf32>
    %cst = arith.constant dense<0.000000e+00> : vector<128x128xf32>
    %3 = tpu.matmul %1, %2, %cst {dimension_numbers = #tpu.dot_dimension_numbers<[1], [0], [0], [1], [0, 0, 1, 1], [], []>} : vector<128x8xf32>, vector<8x128xf32>, vector<128x128xf32> -> vector<128x128xf32>
    %c0_5 = arith.constant 0 : index
    %c0_6 = arith.constant 0 : index
    %4 = vector.load %arg3[%c0_5, %c0_6] : memref<1x128xf32, #tpu.memory_space<vmem>>, vector<1x128xf32>
    %5 = vector.broadcast %4 : vector<1x128xf32> to vector<128x128xf32>
    %6 = arith.addf %3, %5 : vector<128x128xf32>
    %cst_7 = arith.constant 0.000000e+00 : f32
    %7 = vector.broadcast %cst_7 : f32 to vector<128x128xf32>
    %8 = arith.maximumf %6, %7 : vector<128x128xf32>
    %9 = vector.shape_cast %8 : vector<128x128xf32> to vector<16x8x128xf32>
    %cst_8 = arith.constant dense<0xFF800000> : vector<16x128xf32>
    %10 = vector.multi_reduction <maximumf>, %9, %cst_8 [1] : vector<16x8x128xf32> to vector<16x128xf32>
    %c0_9 = arith.constant 0 : index
    %c0_10 = arith.constant 0 : index
    %11 = vector.load %arg4[%c0_9, %c0_10] : memref<128x128xf32, #tpu.memory_space<vmem>>, vector<128x128xf32>
    %cst_11 = arith.constant dense<0.000000e+00> : vector<128x128xf32>
    %12 = tpu.matmul %8, %11, %cst_11 {dimension_numbers = #tpu.dot_dimension_numbers<[1], [0], [0], [1], [0, 0, 1, 1], [], []>} : vector<128x128xf32>, vector<128x128xf32>, vector<128x128xf32> -> vector<128x128xf32>
    %c0_12 = arith.constant 0 : index
    %c0_13 = arith.constant 0 : index
    %13 = vector.load %arg5[%c0_12, %c0_13] : memref<128x128xf32, #tpu.memory_space<vmem>>, vector<128x128xf32>
    %cst_14 = arith.constant dense<0.000000e+00> : vector<16x128xf32>
    %14 = tpu.matmul %10, %13, %cst_14 {dimension_numbers = #tpu.dot_dimension_numbers<[1], [0], [0], [1], [0, 0, 1, 1], [], []>} : vector<16x128xf32>, vector<128x128xf32>, vector<16x128xf32> -> vector<16x128xf32>
    %c0_15 = arith.constant 0 : index
    %c0_16 = arith.constant 0 : index
    %15 = vector.load %arg6[%c0_15, %c0_16] : memref<1x128xf32, #tpu.memory_space<vmem>>, vector<1x128xf32>
    %16 = vector.broadcast %15 : vector<1x128xf32> to vector<16x128xf32>
    %17 = arith.addf %14, %16 : vector<16x128xf32>
    %18 = vector.shape_cast %12 : vector<128x128xf32> to vector<16x8x128xf32>
    %19 = vector.shape_cast %17 : vector<16x128xf32> to vector<16x1x128xf32>
    %20 = vector.broadcast %19 : vector<16x1x128xf32> to vector<16x8x128xf32>
    %21 = arith.addf %18, %20 : vector<16x8x128xf32>
    %cst_17 = arith.constant 0.000000e+00 : f32
    %22 = vector.broadcast %cst_17 : f32 to vector<16x8x128xf32>
    %23 = arith.maximumf %21, %22 : vector<16x8x128xf32>
    %24 = vector.shape_cast %23 : vector<16x8x128xf32> to vector<128x128xf32>
    %cst_18 = arith.constant dense<0xFF800000> : vector<16x128xf32>
    %25 = vector.multi_reduction <maximumf>, %23, %cst_18 [1] : vector<16x8x128xf32> to vector<16x128xf32>
    %c0_19 = arith.constant 0 : index
    %c0_20 = arith.constant 0 : index
    %26 = vector.load %arg7[%c0_19, %c0_20] : memref<128x128xf32, #tpu.memory_space<vmem>>, vector<128x128xf32>
    %cst_21 = arith.constant dense<0.000000e+00> : vector<128x128xf32>
    %27 = tpu.matmul %24, %26, %cst_21 {dimension_numbers = #tpu.dot_dimension_numbers<[1], [0], [0], [1], [0, 0, 1, 1], [], []>} : vector<128x128xf32>, vector<128x128xf32>, vector<128x128xf32> -> vector<128x128xf32>
    %c0_22 = arith.constant 0 : index
    %c0_23 = arith.constant 0 : index
    %28 = vector.load %arg8[%c0_22, %c0_23] : memref<128x128xf32, #tpu.memory_space<vmem>>, vector<128x128xf32>
    %cst_24 = arith.constant dense<0.000000e+00> : vector<16x128xf32>
    %29 = tpu.matmul %25, %28, %cst_24 {dimension_numbers = #tpu.dot_dimension_numbers<[1], [0], [0], [1], [0, 0, 1, 1], [], []>} : vector<16x128xf32>, vector<128x128xf32>, vector<16x128xf32> -> vector<16x128xf32>
    %c0_25 = arith.constant 0 : index
    %c0_26 = arith.constant 0 : index
    %30 = vector.load %arg9[%c0_25, %c0_26] : memref<1x128xf32, #tpu.memory_space<vmem>>, vector<1x128xf32>
    %31 = vector.broadcast %30 : vector<1x128xf32> to vector<16x128xf32>
    %32 = arith.addf %29, %31 : vector<16x128xf32>
    %33 = vector.shape_cast %27 : vector<128x128xf32> to vector<16x8x128xf32>
    %34 = vector.shape_cast %32 : vector<16x128xf32> to vector<16x1x128xf32>
    %35 = vector.broadcast %34 : vector<16x1x128xf32> to vector<16x8x128xf32>
    %36 = arith.addf %33, %35 : vector<16x8x128xf32>
    %cst_27 = arith.constant 0.000000e+00 : f32
    %37 = vector.broadcast %cst_27 : f32 to vector<16x8x128xf32>
    %38 = arith.maximumf %36, %37 : vector<16x8x128xf32>
    %cst_28 = arith.constant dense<0xFF800000> : vector<16x128xf32>
    %39 = vector.multi_reduction <maximumf>, %38, %cst_28 [1] : vector<16x8x128xf32> to vector<16x128xf32>
    %c0_29 = arith.constant 0 : index
    %c0_30 = arith.constant 0 : index
    %40 = vector.load %arg10[%c0_29, %c0_30] : memref<128x384xf32, #tpu.memory_space<vmem>>, vector<128x384xf32>
    %cst_31 = arith.constant dense<0.000000e+00> : vector<16x384xf32>
    %41 = tpu.matmul %39, %40, %cst_31 {dimension_numbers = #tpu.dot_dimension_numbers<[1], [0], [0], [1], [0, 0, 1, 1], [], []>} : vector<16x128xf32>, vector<128x384xf32>, vector<16x384xf32> -> vector<16x384xf32>
    %42 = vector.extract_strided_slice %41 {offsets = [0, 0], sizes = [16, 128], strides = [1, 1]} : vector<16x384xf32> to vector<16x128xf32>
    %43 = vector.shape_cast %42 : vector<16x128xf32> to vector<2x8x128xf32>
    %44 = vector.extract_strided_slice %41 {offsets = [0, 128], sizes = [16, 128], strides = [1, 1]} : vector<16x384xf32> to vector<16x128xf32>
    %45 = vector.shape_cast %44 : vector<16x128xf32> to vector<2x8x128xf32>
    %46 = vector.extract_strided_slice %41 {offsets = [0, 256], sizes = [16, 128], strides = [1, 1]} : vector<16x384xf32> to vector<16x128xf32>
    %47 = vector.shape_cast %46 : vector<16x128xf32> to vector<2x8x128xf32>
    "tpu.trace_start"() <{level = 10 : i32, message = "bpg,bqg->bpq"}> : () -> ()
    %cst_32 = arith.constant dense<0.000000e+00> : vector<2x8x8xf32>
    %48 = tpu.matmul %43, %45, %cst_32 {dimension_numbers = #tpu.dot_dimension_numbers<[2], [2], [1], [1], [0, 0, 0, 1, 1, 1], [0], [0]>} : vector<2x8x128xf32>, vector<2x8x128xf32>, vector<2x8x8xf32> -> vector<2x8x8xf32>
    "tpu.trace_stop"() : () -> ()
    %cst_33 = arith.constant 1.250000e-01 : f32
    %49 = vector.broadcast %cst_33 : f32 to vector<2x8x8xf32>
    %50 = arith.mulf %48, %49 : vector<2x8x8xf32>
    %cst_34 = arith.constant dense<0xFF800000> : vector<2x8xf32>
    %51 = vector.multi_reduction <maximumf>, %50, %cst_34 [2] : vector<2x8x8xf32> to vector<2x8xf32>
    %52 = vector.shape_cast %51 : vector<2x8xf32> to vector<2x8x1xf32>
    %53 = vector.broadcast %52 : vector<2x8x1xf32> to vector<2x8x8xf32>
    %54 = arith.subf %50, %53 : vector<2x8x8xf32>
    %55 = math.exp %54 : vector<2x8x8xf32>
    %cst_35 = arith.constant dense<0.000000e+00> : vector<2x8xf32>
    %56 = vector.multi_reduction <add>, %55, %cst_35 [2] : vector<2x8x8xf32> to vector<2x8xf32>
    %57 = vector.shape_cast %56 : vector<2x8xf32> to vector<2x8x1xf32>
    %58 = tpu.reciprocal %57 {approx = true} : vector<2x8x1xf32> -> vector<2x8x1xf32>
    %59 = vector.broadcast %58 : vector<2x8x1xf32> to vector<2x8x8xf32>
    %60 = arith.mulf %55, %59 : vector<2x8x8xf32>
    "tpu.trace_start"() <{level = 10 : i32, message = "bpq,bqg->bpg"}> : () -> ()
    %cst_36 = arith.constant dense<0.000000e+00> : vector<2x8x128xf32>
    %61 = tpu.matmul %60, %47, %cst_36 {dimension_numbers = #tpu.dot_dimension_numbers<[2], [1], [1], [2], [0, 0, 0, 1, 1, 2], [0], [0]>} : vector<2x8x8xf32>, vector<2x8x128xf32>, vector<2x8x128xf32> -> vector<2x8x128xf32>
    "tpu.trace_stop"() : () -> ()
    %62 = vector.shape_cast %61 : vector<2x8x128xf32> to vector<16x128xf32>
    %c0_37 = arith.constant 0 : index
    %c0_38 = arith.constant 0 : index
    %63 = vector.load %arg11[%c0_37, %c0_38] : memref<128x128xf32, #tpu.memory_space<vmem>>, vector<128x128xf32>
    %cst_39 = arith.constant dense<0.000000e+00> : vector<16x128xf32>
    %64 = tpu.matmul %62, %63, %cst_39 {dimension_numbers = #tpu.dot_dimension_numbers<[1], [0], [0], [1], [0, 0, 1, 1], [], []>} : vector<16x128xf32>, vector<128x128xf32>, vector<16x128xf32> -> vector<16x128xf32>
    %c0_40 = arith.constant 0 : index
    %c0_41 = arith.constant 0 : index
    %65 = vector.load %arg12[%c0_40, %c0_41] : memref<1x128xf32, #tpu.memory_space<vmem>>, vector<1x128xf32>
    %66 = vector.broadcast %65 : vector<1x128xf32> to vector<16x128xf32>
    %67 = arith.addf %64, %66 : vector<16x128xf32>
    %cst_42 = arith.constant 0.000000e+00 : f32
    %68 = vector.broadcast %cst_42 : f32 to vector<16x128xf32>
    %69 = arith.maximumf %67, %68 : vector<16x128xf32>
    %c0_43 = arith.constant 0 : index
    %c0_44 = arith.constant 0 : index
    %70 = vector.load %arg13[%c0_43, %c0_44] : memref<128x128xf32, #tpu.memory_space<vmem>>, vector<128x128xf32>
    %cst_45 = arith.constant dense<0.000000e+00> : vector<16x128xf32>
    %71 = tpu.matmul %69, %70, %cst_45 {dimension_numbers = #tpu.dot_dimension_numbers<[1], [0], [0], [1], [0, 0, 1, 1], [], []>} : vector<16x128xf32>, vector<128x128xf32>, vector<16x128xf32> -> vector<16x128xf32>
    %c0_46 = arith.constant 0 : index
    %c0_47 = arith.constant 0 : index
    %72 = vector.load %arg14[%c0_46, %c0_47] : memref<1x128xf32, #tpu.memory_space<vmem>>, vector<1x128xf32>
    %73 = vector.broadcast %72 : vector<1x128xf32> to vector<16x128xf32>
    %74 = arith.addf %71, %73 : vector<16x128xf32>
    %c0_48 = arith.constant 0 : index
    %c0_49 = arith.constant 0 : index
    %75 = vector.load %arg15[%c0_48, %c0_49] : memref<16x128xf32, #tpu.memory_space<vmem>>, vector<16x128xf32>
    tpu.vector_store %arg15[%c0_48, %c0_49], %74 {strides = array<i32>} : memref<16x128xf32, #tpu.memory_space<vmem>>, vector<16x128xf32>,
    return
  }
  func.func @transform_0(%arg0: i32) -> (i32, i32, i32, i32) {
    %c0_i32 = arith.constant 0 : i32
    %c0_i32_0 = arith.constant 0 : i32
    %c0_i32_1 = arith.constant 0 : i32
    %c0_i32_2 = arith.constant 0 : i32
    return %arg0, %c0_i32, %c0_i32_0, %c0_i32_1 : i32, i32, i32, i32
  }
  func.func @transform_1(%arg0: i32) -> (i32, i32) {
    %c0_i32 = arith.constant 0 : i32
    %c0_i32_0 = arith.constant 0 : i32
    %c0_i32_1 = arith.constant 0 : i32
    return %c0_i32, %c0_i32_0 : i32, i32
  }
  func.func @transform_2(%arg0: i32) -> (i32, i32) {
    %c0_i32 = arith.constant 0 : i32
    %c0_i32_0 = arith.constant 0 : i32
    %c0_i32_1 = arith.constant 0 : i32
    return %c0_i32, %c0_i32_0 : i32, i32
  }
  func.func @transform_3(%arg0: i32) -> (i32, i32) {
    %c0_i32 = arith.constant 0 : i32
    %c0_i32_0 = arith.constant 0 : i32
    %c0_i32_1 = arith.constant 0 : i32
    return %c0_i32, %c0_i32_0 : i32, i32
  }
  func.func @transform_4(%arg0: i32) -> (i32, i32) {
    %c0_i32 = arith.constant 0 : i32
    %c0_i32_0 = arith.constant 0 : i32
    %c0_i32_1 = arith.constant 0 : i32
    return %c0_i32, %c0_i32_0 : i32, i32
  }
  func.func @transform_5(%arg0: i32) -> (i32, i32) {
    %c0_i32 = arith.constant 0 : i32
    %c0_i32_0 = arith.constant 0 : i32
    %c0_i32_1 = arith.constant 0 : i32
    return %c0_i32, %c0_i32_0 : i32, i32
  }
  func.func @transform_6(%arg0: i32) -> (i32, i32) {
    %c0_i32 = arith.constant 0 : i32
    %c0_i32_0 = arith.constant 0 : i32
    %c0_i32_1 = arith.constant 0 : i32
    return %c0_i32, %c0_i32_0 : i32, i32
  }
  func.func @transform_7(%arg0: i32) -> (i32, i32) {
    %c0_i32 = arith.constant 0 : i32
    %c0_i32_0 = arith.constant 0 : i32
    %c0_i32_1 = arith.constant 0 : i32
    return %c0_i32, %c0_i32_0 : i32, i32
  }
  func.func @transform_8(%arg0: i32) -> (i32, i32) {
    %c0_i32 = arith.constant 0 : i32
    %c0_i32_0 = arith.constant 0 : i32
    %c0_i32_1 = arith.constant 0 : i32
    return %c0_i32, %c0_i32_0 : i32, i32
  }
  func.func @transform_9(%arg0: i32) -> (i32, i32) {
    %c0_i32 = arith.constant 0 : i32
    %c0_i32_0 = arith.constant 0 : i32
    %c0_i32_1 = arith.constant 0 : i32
    return %c0_i32, %c0_i32_0 : i32, i32
  }
  func.func @transform_10(%arg0: i32) -> (i32, i32) {
    %c0_i32 = arith.constant 0 : i32
    %c0_i32_0 = arith.constant 0 : i32
    %c0_i32_1 = arith.constant 0 : i32
    return %c0_i32, %c0_i32_0 : i32, i32
  }
  func.func @transform_11(%arg0: i32) -> (i32, i32) {
    %c0_i32 = arith.constant 0 : i32
    %c0_i32_0 = arith.constant 0 : i32
    %c0_i32_1 = arith.constant 0 : i32
    return %c0_i32, %c0_i32_0 : i32, i32
  }
  func.func @transform_12(%arg0: i32) -> (i32, i32) {
    %c0_i32 = arith.constant 0 : i32
    %c0_i32_0 = arith.constant 0 : i32
    %c0_i32_1 = arith.constant 0 : i32
    return %c0_i32, %c0_i32_0 : i32, i32
  }
  func.func @transform_13(%arg0: i32) -> (i32, i32) {
    %c0_i32 = arith.constant 0 : i32
    %c0_i32_0 = arith.constant 0 : i32
    %c0_i32_1 = arith.constant 0 : i32
    return %c0_i32, %c0_i32_0 : i32, i32
  }
  func.func @transform_14(%arg0: i32) -> (i32, i32) {
    %c0_i32 = arith.constant 0 : i32
    %c0_i32_0 = arith.constant 0 : i32
    return %arg0, %c0_i32 : i32, i32
  }
}

</mosaic_0001>

<llo_original>
// kernel: tpu_custom_call.1
$region0: #{tpu_custom_call.1}
  #allocation0 [shape = 'u32[]', space=smem, size = 0x4, offset = 0x4, fixed_abs, tag = 'smem constant byte address 0x4 - core index']
  #allocation1 [shape = 'u32[144,128]{1,0:T(1,128)}', space=vmem, size = 0x12000, scoped, tag = 'internal scratch']
  %s0 = inlined_call_operand.hbm [shape: f32[2,8,8,8], index: 0, kind: input, shape index: {}]
  %s1 = inlined_call_operand.hbm [shape: f32[8,128], index: 1, kind: input, shape index: {}]
  %s2 = inlined_call_operand.vmem [shape: f32[1,128], index: 2, kind: input, shape index: {}]
  %s3 = inlined_call_operand.hbm [shape: f32[128,128], index: 3, kind: input, shape index: {}]
  %s4 = inlined_call_operand.hbm [shape: f32[128,128], index: 4, kind: input, shape index: {}]
  %s5 = inlined_call_operand.vmem [shape: f32[1,128], index: 5, kind: input, shape index: {}]
  %s6 = inlined_call_operand.hbm [shape: f32[128,128], index: 6, kind: input, shape index: {}]
  %s7 = inlined_call_operand.hbm [shape: f32[128,128], index: 7, kind: input, shape index: {}]
  %s8 = inlined_call_operand.vmem [shape: f32[1,128], index: 8, kind: input, shape index: {}]
  %s9 = inlined_call_operand.hbm [shape: f32[128,384], index: 9, kind: input, shape index: {}]
  %s10 = inlined_call_operand.hbm [shape: f32[128,128], index: 10, kind: input, shape index: {}]
  %s11 = inlined_call_operand.vmem [shape: f32[1,128], index: 11, kind: input, shape index: {}]
  %s12 = inlined_call_operand.hbm [shape: f32[128,128], index: 12, kind: input, shape index: {}]
  %s13 = inlined_call_operand.vmem [shape: f32[1,128], index: 13, kind: input, shape index: {}]
  %s14 = inlined_call_operand.hbm [shape: f32[16,128], index: 14, kind: output, shape index: {}]
  %s15 = sld [smem:[#allocation0]]
  $region102: #{tpu_custom_call.1} parent=0
    _
  %s17 = ssub.s32 1, %s15
  %s18 = scalar_select 0, %s17, %s15
  $region1: #{tpu_custom_call.1} parent=0
    #allocation2 [shape = 'u8[65536]{0}', space=vmem, size = 0x10000, scoped, tag = 'input window, operand 0, single buffered']
    #allocation3 [shape = 's32[1]{0}', space=sflag, size = 0x4, scoped, tag = 'scoped memory for tpu_custom_call.1']
    #allocation4 [shape = 's32[1]{0}', space=sflag, size = 0x4, scoped, tag = 'scoped memory for tpu_custom_call.1']
    #allocation5 [shape = 'u8[4096]{0}', space=vmem, size = 0x1000, scoped, tag = 'input window, operand 1, single buffered']
    #allocation6 [shape = 's32[1]{0}', space=sflag, size = 0x4, scoped, tag = 'scoped memory for tpu_custom_call.1']
    #allocation7 [shape = 'u8[65536]{0}', space=vmem, size = 0x10000, scoped, tag = 'input window, operand 3, single buffered']
    #allocation8 [shape = 'u8[65536]{0}', space=vmem, size = 0x10000, scoped, tag = 'input window, operand 4, single buffered']
    #allocation9 [shape = 's32[1]{0}', space=sflag, size = 0x4, scoped, tag = 'scoped memory for tpu_custom_call.1']
    #allocation10 [shape = 'u8[65536]{0}', space=vmem, size = 0x10000, scoped, tag = 'input window, operand 6, single buffered']
    #allocation11 [shape = 'u8[65536]{0}', space=vmem, size = 0x10000, scoped, tag = 'input window, operand 7, single buffered']
    #allocation12 [shape = 's32[1]{0}', space=sflag, size = 0x4, scoped, tag = 'scoped memory for tpu_custom_call.1']
    #allocation13 [shape = 'u8[196608]{0}', space=vmem, size = 0x30000, scoped, tag = 'input window, operand 9, single buffered']
    #allocation14 [shape = 'u8[65536]{0}', space=vmem, size = 0x10000, scoped, tag = 'input window, operand 10, single buffered']
    #allocation15 [shape = 's32[1]{0}', space=sflag, size = 0x4, scoped, tag = 'scoped memory for tpu_custom_call.1']
    #allocation16 [shape = 'u8[65536]{0}', space=vmem, size = 0x10000, scoped, tag = 'input window, operand 12, single buffered']
    #allocation17 [shape = 'u8[8192]{0}', space=vmem, size = 0x2000, scoped, tag = 'output window, operand 0, single buffered']
    %19 = vsyncpa [#allocation3], 0
    %20 = vsyncpa [#allocation6], 0
    %21 = vsyncpa [#allocation9], 0
    %22 = vsyncpa [#allocation12], 0
    %23 = vsyncpa [#allocation15], 0
    %24 = vsyncpa [#allocation4], 0
    // Predicated region
    $region2: #{tpu_custom_call.1} parent=1 // pred_check
      _
    $region3: #{tpu_custom_call.1} parent=1 // pred_check_branch
      %26 = sbr.rel (0) target = $region5
    $region4: #{tpu_custom_call.1} parent=1 // pred_region
      %s28 = ssub.s32 2048, 2048
      %29 = vsyncadd [#allocation3], %s28
      %s30 = sshll.u32 [#allocation2], 4
      %s31 = int_to_ptr.vmem [resolvable:$true] %s30
      %36 = dma.hbm_to_vmem [thread:$0]  %s0, 2048, %s31, [#allocation3], 128, 128, 8
    $region5: #{tpu_custom_call.1} parent=1 // pred_fallthru
      _
    // Predicated region
    $region6: #{tpu_custom_call.1} parent=1 // pred_check
      _
    $region7: #{tpu_custom_call.1} parent=1 // pred_check_branch
      %38 = sbr.rel (0) target = $region9
    $region8: #{tpu_custom_call.1} parent=1 // pred_region
      %s40 = ssub.s32 128, 128
      %41 = vsyncadd [#allocation6], %s40
      %s43 = sshll.u32 [#allocation5], 4
      %s44 = int_to_ptr.vmem [resolvable:$true] %s43
      %46 = dma.hbm_to_vmem [thread:$0]  %s1, 128, %s44, [#allocation6]
    $region9: #{tpu_custom_call.1} parent=1 // pred_fallthru
      _
    // Predicated region
    $region10: #{tpu_custom_call.1} parent=1 // pred_check
      _
    $region11: #{tpu_custom_call.1} parent=1 // pred_check_branch
      %48 = sbr.rel (0) target = $region13
    $region12: #{tpu_custom_call.1} parent=1 // pred_region
      _
    $region13: #{tpu_custom_call.1} parent=1 // pred_fallthru
      _
    // Predicated region
    $region14: #{tpu_custom_call.1} parent=1 // pred_check
      _
    $region15: #{tpu_custom_call.1} parent=1 // pred_check_branch
      %50 = sbr.rel (0) target = $region17
    $region16: #{tpu_custom_call.1} parent=1 // pred_region
      %s52 = ssub.s32 2048, 2048
      %53 = vsyncadd [#allocation6], %s52
      %s54 = sshll.u32 [#allocation7], 4
      %s55 = int_to_ptr.vmem [resolvable:$true] %s54
      %60 = dma.hbm_to_vmem [thread:$0]  %s3, 2048, %s55, [#allocation6], 128, 128, 8
    $region17: #{tpu_custom_call.1} parent=1 // pred_fallthru
      _
    // Predicated region
    $region18: #{tpu_custom_call.1} parent=1 // pred_check
      _
    $region19: #{tpu_custom_call.1} parent=1 // pred_check_branch
      %62 = sbr.rel (0) target = $region21
    $region20: #{tpu_custom_call.1} parent=1 // pred_region
      %s64 = ssub.s32 2048, 2048
      %65 = vsyncadd [#allocation9], %s64
      %s66 = sshll.u32 [#allocation8], 4
      %s67 = int_to_ptr.vmem [resolvable:$true] %s66
      %72 = dma.hbm_to_vmem [thread:$0]  %s4, 2048, %s67, [#allocation9], 128, 128, 8
    $region21: #{tpu_custom_call.1} parent=1 // pred_fallthru
      _
    // Predicated region
    $region22: #{tpu_custom_call.1} parent=1 // pred_check
      _
    $region23: #{tpu_custom_call.1} parent=1 // pred_check_branch
      %74 = sbr.rel (0) target = $region25
    $region24: #{tpu_custom_call.1} parent=1 // pred_region
      _
    $region25: #{tpu_custom_call.1} parent=1 // pred_fallthru
      _
    // Predicated region
    $region26: #{tpu_custom_call.1} parent=1 // pred_check
      _
    $region27: #{tpu_custom_call.1} parent=1 // pred_check_branch
      %76 = sbr.rel (0) target = $region29
    $region28: #{tpu_custom_call.1} parent=1 // pred_region
      %s78 = ssub.s32 2048, 2048
      %79 = vsyncadd [#allocation9], %s78
      %s80 = sshll.u32 [#allocation10], 4
      %s81 = int_to_ptr.vmem [resolvable:$true] %s80
      %86 = dma.hbm_to_vmem [thread:$0]  %s6, 2048, %s81, [#allocation9], 128, 128, 8
    $region29: #{tpu_custom_call.1} parent=1 // pred_fallthru
      _
    // Predicated region
    $region30: #{tpu_custom_call.1} parent=1 // pred_check
      _
    $region31: #{tpu_custom_call.1} parent=1 // pred_check_branch
      %88 = sbr.rel (0) target = $region33
    $region32: #{tpu_custom_call.1} parent=1 // pred_region
      %s90 = ssub.s32 2048, 2048
      %91 = vsyncadd [#allocation12], %s90
      %s92 = sshll.u32 [#allocation11], 4
      %s93 = int_to_ptr.vmem [resolvable:$true] %s92
      %98 = dma.hbm_to_vmem [thread:$0]  %s7, 2048, %s93, [#allocation12], 128, 128, 8
    $region33: #{tpu_custom_call.1} parent=1 // pred_fallthru
      _
    // Predicated region
    $region34: #{tpu_custom_call.1} parent=1 // pred_check
      _
    $region35: #{tpu_custom_call.1} parent=1 // pred_check_branch
      %100 = sbr.rel (0) target = $region37
    $region36: #{tpu_custom_call.1} parent=1 // pred_region
      _
    $region37: #{tpu_custom_call.1} parent=1 // pred_fallthru
      _
    // Predicated region
    $region38: #{tpu_custom_call.1} parent=1 // pred_check
      _
    $region39: #{tpu_custom_call.1} parent=1 // pred_check_branch
      %102 = sbr.rel (0) target = $region41
    $region40: #{tpu_custom_call.1} parent=1 // pred_region
      %s104 = ssub.s32 6144, 6144
      %105 = vsyncadd [#allocation12], %s104
      %s106 = sshll.u32 [#allocation13], 4
      %s107 = int_to_ptr.vmem [resolvable:$true] %s106
      %112 = dma.hbm_to_vmem [thread:$0]  %s9, 6144, %s107, [#allocation12], 384, 384, 24
    $region41: #{tpu_custom_call.1} parent=1 // pred_fallthru
      _
    // Predicated region
    $region42: #{tpu_custom_call.1} parent=1 // pred_check
      _
    $region43: #{tpu_custom_call.1} parent=1 // pred_check_branch
      %114 = sbr.rel (0) target = $region45
    $region44: #{tpu_custom_call.1} parent=1 // pred_region
      %s116 = ssub.s32 2048, 2048
      %117 = vsyncadd [#allocation15], %s116
      %s118 = sshll.u32 [#allocation14], 4
      %s119 = int_to_ptr.vmem [resolvable:$true] %s118
      %124 = dma.hbm_to_vmem [thread:$0]  %s10, 2048, %s119, [#allocation15], 128, 128, 8
    $region45: #{tpu_custom_call.1} parent=1 // pred_fallthru
      _
    // Predicated region
    $region46: #{tpu_custom_call.1} parent=1 // pred_check
      _
    $region47: #{tpu_custom_call.1} parent=1 // pred_check_branch
      %126 = sbr.rel (0) target = $region49
    $region48: #{tpu_custom_call.1} parent=1 // pred_region
      _
    $region49: #{tpu_custom_call.1} parent=1 // pred_fallthru
      _
    // Predicated region
    $region50: #{tpu_custom_call.1} parent=1 // pred_check
      _
    $region51: #{tpu_custom_call.1} parent=1 // pred_check_branch
      %128 = sbr.rel (0) target = $region53
    $region52: #{tpu_custom_call.1} parent=1 // pred_region
      %s130 = ssub.s32 2048, 2048
      %131 = vsyncadd [#allocation15], %s130
      %s132 = sshll.u32 [#allocation16], 4
      %s133 = int_to_ptr.vmem [resolvable:$true] %s132
      %138 = dma.hbm_to_vmem [thread:$0]  %s12, 2048, %s133, [#allocation15], 128, 128, 8
    $region53: #{tpu_custom_call.1} parent=1 // pred_fallthru
      _
    // Predicated region
    $region54: #{tpu_custom_call.1} parent=1 // pred_check
      _
    $region55: #{tpu_custom_call.1} parent=1 // pred_check_branch
      %140 = sbr.rel (0) target = $region57
    $region56: #{tpu_custom_call.1} parent=1 // pred_region
      _
    $region57: #{tpu_custom_call.1} parent=1 // pred_fallthru
      _
    // Predicated region
    $region58: #{tpu_custom_call.1} parent=1 // pred_check
      _
    $region59: #{tpu_custom_call.1} parent=1 // pred_check_branch
      %142 = sbr.rel (0) target = $region61
    $region60: #{tpu_custom_call.1} parent=1 // pred_region
      %143 = dma.done [#allocation3], 2048
    $region61: #{tpu_custom_call.1} parent=1 // pred_fallthru
      _
    // Predicated region
    $region62: #{tpu_custom_call.1} parent=1 // pred_check
      _
    $region63: #{tpu_custom_call.1} parent=1 // pred_check_branch
      %145 = sbr.rel (0) target = $region65
    $region64: #{tpu_custom_call.1} parent=1 // pred_region
      %146 = dma.done [#allocation6], 128
    $region65: #{tpu_custom_call.1} parent=1 // pred_fallthru
      _
    // Predicated region
    $region66: #{tpu_custom_call.1} parent=1 // pred_check
      _
    $region67: #{tpu_custom_call.1} parent=1 // pred_check_branch
      %148 = sbr.rel (0) target = $region69
    $region68: #{tpu_custom_call.1} parent=1 // pred_region
      %149 = dma.done [#allocation6], 2048
    $region69: #{tpu_custom_call.1} parent=1 // pred_fallthru
      _
    // Predicated region
    $region70: #{tpu_custom_call.1} parent=1 // pred_check
      _
    $region71: #{tpu_custom_call.1} parent=1 // pred_check_branch
      %151 = sbr.rel (0) target = $region73
    $region72: #{tpu_custom_call.1} parent=1 // pred_region
      %152 = dma.done [#allocation9], 2048
    $region73: #{tpu_custom_call.1} parent=1 // pred_fallthru
      _
    // Predicated region
    $region74: #{tpu_custom_call.1} parent=1 // pred_check
      _
    $region75: #{tpu_custom_call.1} parent=1 // pred_check_branch
      %154 = sbr.rel (0) target = $region77
    $region76: #{tpu_custom_call.1} parent=1 // pred_region
      %155 = dma.done [#allocation9], 2048
    $region77: #{tpu_custom_call.1} parent=1 // pred_fallthru
      _
    // Predicated region
    $region78: #{tpu_custom_call.1} parent=1 // pred_check
      _
    $region79: #{tpu_custom_call.1} parent=1 // pred_check_branch
      %157 = sbr.rel (0) target = $region81
    $region80: #{tpu_custom_call.1} parent=1 // pred_region
      %158 = dma.done [#allocation12], 2048
    $region81: #{tpu_custom_call.1} parent=1 // pred_fallthru
      _
    // Predicated region
    $region82: #{tpu_custom_call.1} parent=1 // pred_check
      _
    $region83: #{tpu_custom_call.1} parent=1 // pred_check_branch
      %160 = sbr.rel (0) target = $region85
    $region84: #{tpu_custom_call.1} parent=1 // pred_region
      %161 = dma.done [#allocation12], 6144
    $region85: #{tpu_custom_call.1} parent=1 // pred_fallthru
      _
    // Predicated region
    $region86: #{tpu_custom_call.1} parent=1 // pred_check
      _
    $region87: #{tpu_custom_call.1} parent=1 // pred_check_branch
      %163 = sbr.rel (0) target = $region89
    $region88: #{tpu_custom_call.1} parent=1 // pred_region
      %164 = dma.done [#allocation15], 2048
    $region89: #{tpu_custom_call.1} parent=1 // pred_fallthru
      _
    // Predicated region
    $region90: #{tpu_custom_call.1} parent=1 // pred_check
      _
    $region91: #{tpu_custom_call.1} parent=1 // pred_check_branch
      %166 = sbr.rel (0) target = $region93
    $region92: #{tpu_custom_call.1} parent=1 // pred_region
      %167 = dma.done [#allocation15], 2048
    $region93: #{tpu_custom_call.1} parent=1 // pred_fallthru
      _
    %v168 = vld [vmem:[#allocation2] sm:$0xff]
    %v169 = vld [vmem:[#allocation2 + $0x8] sm:$0xff]
    %v170 = vld [vmem:[#allocation2 + $0x10] sm:$0xff]
    %v171 = vld [vmem:[#allocation2 + $0x18] sm:$0xff]
    %v172 = vld [vmem:[#allocation2 + $0x20] sm:$0xff]
    %v173 = vld [vmem:[#allocation2 + $0x28] sm:$0xff]
    %v174 = vld [vmem:[#allocation2 + $0x30] sm:$0xff]
    %v175 = vld [vmem:[#allocation2 + $0x38] sm:$0xff]
    %v176 = vld [vmem:[#allocation2 + $0x40] sm:$0xff]
    %v177 = vld [vmem:[#allocation2 + $0x48] sm:$0xff]
    %v178 = vld [vmem:[#allocation2 + $0x50] sm:$0xff]
    %v179 = vld [vmem:[#allocation2 + $0x58] sm:$0xff]
    %v180 = vld [vmem:[#allocation2 + $0x60] sm:$0xff]
    %v181 = vld [vmem:[#allocation2 + $0x68] sm:$0xff]
    %v182 = vld [vmem:[#allocation2 + $0x70] sm:$0xff]
    %v183 = vld [vmem:[#allocation2 + $0x78] sm:$0xff]
    %v184 = vld [vmem:[#allocation5] sm:$0xff]
    %v185 = vld [vmem:[%s2] sm:$0x1]
    %v187 = vlaneseq
    %v188 = vshrl.u32 %v187, 7
    %v189 = vsub.s32 0, %v188
    %v190 = vrot.slane %v185, %v189
    %vm192 = vcmask 64512
    %v194 = vsel %vm192, %v168, 0
    %v197 = vsel %vm192, %v169, 0
    %v200 = vsel %vm192, %v170, 0
    %v203 = vsel %vm192, %v171, 0
    %v206 = vsel %vm192, %v172, 0
    %v209 = vsel %vm192, %v173, 0
    %v212 = vsel %vm192, %v174, 0
    %v215 = vsel %vm192, %v175, 0
    %v218 = vsel %vm192, %v176, 0
    %v221 = vsel %vm192, %v177, 0
    %v224 = vsel %vm192, %v178, 0
    %v227 = vsel %vm192, %v179, 0
    %v230 = vsel %vm192, %v180, 0
    %v233 = vsel %vm192, %v181, 0
    %v236 = vsel %vm192, %v182, 0
    %v239 = vsel %vm192, %v183, 0
    %241 = vmatprep.subr.mxu0 0.0
    %242 = vmatpush1.msra.mxu0 %v184
    %243 = vmatprep.subr.mxu0 0.0
    %244 = vmatpush1.msra.mxu0 0.0
    %245 = vmatprep.subr.mxu0 0.0
    %246 = vmatpush1.msra.mxu0 0.0
    %247 = vmatprep.subr.mxu0 0.0
    %248 = vmatpush1.msra.mxu0 0.0
    %249 = vmatprep.subr.mxu0 0.0
    %250 = vmatpush1.msra.mxu0 0.0
    %251 = vmatprep.subr.mxu0 0.0
    %252 = vmatpush1.msra.mxu0 0.0
    %253 = vmatprep.subr.mxu0 0.0
    %254 = vmatpush1.msra.mxu0 0.0
    %255 = vmatprep.subr.mxu0 0.0
    %256 = vmatpush1.msra.mxu0 0.0
    %257 = vmatprep.subr.mxu0 0.0
    %258 = vmatpush1.msra.mxu0 0.0
    %259 = vmatprep.subr.mxu0 0.0
    %260 = vmatpush1.msra.mxu0 0.0
    %261 = vmatprep.subr.mxu0 0.0
    %262 = vmatpush1.msra.mxu0 0.0
    %263 = vmatprep.subr.mxu0 0.0
    %264 = vmatpush1.msra.mxu0 0.0
    %265 = vmatprep.subr.mxu0 0.0
    %266 = vmatpush1.msra.mxu0 0.0
    %267 = vmatprep.subr.mxu0 0.0
    %268 = vmatpush1.msra.mxu0 0.0
    %269 = vmatprep.subr.mxu0 0.0
    %270 = vmatpush1.msra.mxu0 0.0
    %271 = vmatprep.subr.mxu0 0.0
    %272 = vmatpush1.msra.mxu0 0.0
    %273 = vmatprep.subr.mxu0 0.0
    %274 = vmatpush1.msra.mxu0 0.0
    %275 = vmatprep.subr.mxu0 0.0
    %276 = vmatpush1.msra.mxu0 0.0
    %277 = vmatprep.subr.mxu0 0.0
    %278 = vmatpush1.msra.mxu0 0.0
    %279 = vmatprep.subr.mxu0 0.0
    %280 = vmatpush1.msra.mxu0 0.0
    %281 = vmatprep.subr.mxu0 0.0
    %282 = vmatpush1.msra.mxu0 0.0
    %283 = vmatprep.subr.mxu0 0.0
    %284 = vmatpush1.msra.mxu0 0.0
    %285 = vmatprep.subr.mxu0 0.0
    %286 = vmatpush1.msra.mxu0 0.0
    %287 = vmatprep.subr.mxu0 0.0
    %288 = vmatpush1.msra.mxu0 0.0
    %289 = vmatprep.subr.mxu0 0.0
    %290 = vmatpush1.msra.mxu0 0.0
    %291 = vmatprep.subr.mxu0 0.0
    %292 = vmatpush1.msra.mxu0 0.0
    %293 = vmatprep.subr.mxu0 0.0
    %294 = vmatpush1.msra.mxu0 0.0
    %295 = vmatprep.subr.mxu0 0.0
    %296 = vmatpush1.msra.mxu0 0.0
    %297 = vmatprep.subr.mxu0 0.0
    %298 = vmatpush1.msra.mxu0 0.0
    %299 = vmatprep.subr.mxu0 0.0
    %300 = vmatpush1.msra.mxu0 0.0
    %301 = vmatprep.subr.mxu0 0.0
    %302 = vmatpush1.msra.mxu0 0.0
    %303 = vmatprep.subr.mxu0 0.0
    %304 = vmatpush1.msra.mxu0 0.0
    %305 = vmatprep.mubr.f32.mxu0 0.0
    %306 = vmatmul.mubr.f32.gmra.mrb[0].mxu0 %v194
    %v307 = vpop.f32.mrb[0].mxu0
    %v308 = vadd.f32 %v190, %v307
    %v309 = vpop.f32.mrb[0].mxu0
    %310 = vmatprep.mubr.f32.mxu0 0.0
    %311 = vmatmul.mubr.f32.gmra.mrb[0].mxu0 %v197
    %v312 = vpop.f32.mrb[0].mxu0
    %v313 = vadd.f32 %v190, %v312
    %v314 = vpop.f32.mrb[0].mxu0
    %315 = vmatprep.mubr.f32.mxu0 0.0
    %316 = vmatmul.mubr.f32.gmra.mrb[0].mxu0 %v200
    %v317 = vpop.f32.mrb[0].mxu0
    %v318 = vadd.f32 %v190, %v317
    %v319 = vpop.f32.mrb[0].mxu0
    %320 = vmatprep.mubr.f32.mxu0 0.0
    %321 = vmatmul.mubr.f32.gmra.mrb[0].mxu0 %v203
    %v322 = vpop.f32.mrb[0].mxu0
    %v323 = vadd.f32 %v190, %v322
    %v324 = vpop.f32.mrb[0].mxu0
    %325 = vmatprep.mubr.f32.mxu0 0.0
    %326 = vmatmul.mubr.f32.gmra.mrb[0].mxu0 %v206
    %v327 = vpop.f32.mrb[0].mxu0
    %v328 = vadd.f32 %v190, %v327
    %v329 = vpop.f32.mrb[0].mxu0
    %330 = vmatprep.mubr.f32.mxu0 0.0
    %331 = vmatmul.mubr.f32.gmra.mrb[0].mxu0 %v209
    %v332 = vpop.f32.mrb[0].mxu0
    %v333 = vadd.f32 %v190, %v332
    %v334 = vpop.f32.mrb[0].mxu0
    %335 = vmatprep.mubr.f32.mxu0 0.0
    %336 = vmatmul.mubr.f32.gmra.mrb[0].mxu0 %v212
    %v337 = vpop.f32.mrb[0].mxu0
    %v338 = vadd.f32 %v190, %v337
    %v339 = vpop.f32.mrb[0].mxu0
    %340 = vmatprep.mubr.f32.mxu0 0.0
    %341 = vmatmul.mubr.f32.gmra.mrb[0].mxu0 %v215
    %v342 = vpop.f32.mrb[0].mxu0
    %v343 = vadd.f32 %v190, %v342
    %v344 = vpop.f32.mrb[0].mxu0
    %345 = vmatprep.mubr.f32.mxu0 0.0
    %346 = vmatmul.mubr.f32.gmra.mrb[0].mxu0 %v218
    %v347 = vpop.f32.mrb[0].mxu0
    %v348 = vadd.f32 %v190, %v347
    %v349 = vpop.f32.mrb[0].mxu0
    %350 = vmatprep.mubr.f32.mxu0 0.0
    %351 = vmatmul.mubr.f32.gmra.mrb[0].mxu0 %v221
    %v352 = vpop.f32.mrb[0].mxu0
    %v353 = vadd.f32 %v190, %v352
    %v354 = vpop.f32.mrb[0].mxu0
    %355 = vmatprep.mubr.f32.mxu0 0.0
    %356 = vmatmul.mubr.f32.gmra.mrb[0].mxu0 %v224
    %v357 = vpop.f32.mrb[0].mxu0
    %v358 = vadd.f32 %v190, %v357
    %v359 = vpop.f32.mrb[0].mxu0
    %360 = vmatprep.mubr.f32.mxu0 0.0
    %361 = vmatmul.mubr.f32.gmra.mrb[0].mxu0 %v227
    %v362 = vpop.f32.mrb[0].mxu0
    %v363 = vadd.f32 %v190, %v362
    %v364 = vpop.f32.mrb[0].mxu0
    %365 = vmatprep.mubr.f32.mxu0 0.0
    %366 = vmatmul.mubr.f32.gmra.mrb[0].mxu0 %v230
    %v367 = vpop.f32.mrb[0].mxu0
    %v368 = vadd.f32 %v190, %v367
    %v369 = vpop.f32.mrb[0].mxu0
    %370 = vmatprep.mubr.f32.mxu0 0.0
    %371 = vmatmul.mubr.f32.gmra.mrb[0].mxu0 %v233
    %v372 = vpop.f32.mrb[0].mxu0
    %v373 = vadd.f32 %v190, %v372
    %v374 = vpop.f32.mrb[0].mxu0
    %375 = vmatprep.mubr.f32.mxu0 0.0
    %376 = vmatmul.mubr.f32.gmra.mrb[0].mxu0 %v236
    %v377 = vpop.f32.mrb[0].mxu0
    %v378 = vadd.f32 %v190, %v377
    %v379 = vpop.f32.mrb[0].mxu0
    %380 = vmatprep.mubr.f32.mxu0 0.0
    %381 = vmatmul.mubr.f32.gmra.mrb[0].mxu0 %v239
    %v382 = vpop.f32.mrb[0].mxu0
    %v383 = vadd.f32 %v190, %v382
    %v384 = vpop.f32.mrb[0].mxu0
    %385 = vdwg.mxu0
    %v386 = vmax.f32 %v308, 0.0
    %v387 = vmax.f32 %v313, 0.0
    %v388 = vmax.f32 %v318, 0.0
    %v389 = vmax.f32 %v323, 0.0
    %v390 = vmax.f32 %v328, 0.0
    %v391 = vmax.f32 %v333, 0.0
    %v392 = vmax.f32 %v338, 0.0
    %v393 = vmax.f32 %v343, 0.0
    %v394 = vmax.f32 %v348, 0.0
    %v395 = vmax.f32 %v353, 0.0
    %v396 = vmax.f32 %v358, 0.0
    %v397 = vmax.f32 %v363, 0.0
    %v398 = vmax.f32 %v368, 0.0
    %v399 = vmax.f32 %v373, 0.0
    %v400 = vmax.f32 %v378, 0.0
    %v401 = vmax.f32 %v383, 0.0
    %v402 = vrot.slane %v386, 4
    %v403 = vmax.f32 %v386, %v402
    %v404 = vrot.slane %v403, 2
    %v405 = vmax.f32 %v403, %v404
    %v406 = vrot.slane %v405, 1
    %v407 = vmax.f32 %v405, %v406
    %v408 = vrot.slane %v387, 4
    %v409 = vmax.f32 %v387, %v408
    %v410 = vrot.slane %v409, 2
    %v411 = vmax.f32 %v409, %v410
    %v412 = vrot.slane %v411, 1
    %v413 = vmax.f32 %v411, %v412
    %v414 = vrot.slane %v388, 4
    %v415 = vmax.f32 %v388, %v414
    %v416 = vrot.slane %v415, 2
    %v417 = vmax.f32 %v415, %v416
    %v418 = vrot.slane %v417, 1
    %v419 = vmax.f32 %v417, %v418
    %v420 = vrot.slane %v389, 4
    %v421 = vmax.f32 %v389, %v420
    %v422 = vrot.slane %v421, 2
    %v423 = vmax.f32 %v421, %v422
    %v424 = vrot.slane %v423, 1
    %v425 = vmax.f32 %v423, %v424
    %v426 = vrot.slane %v390, 4
    %v427 = vmax.f32 %v390, %v426
    %v428 = vrot.slane %v427, 2
    %v429 = vmax.f32 %v427, %v428
    %v430 = vrot.slane %v429, 1
    %v431 = vmax.f32 %v429, %v430
    %v432 = vrot.slane %v391, 4
    %v433 = vmax.f32 %v391, %v432
    %v434 = vrot.slane %v433, 2
    %v435 = vmax.f32 %v433, %v434
    %v436 = vrot.slane %v435, 1
    %v437 = vmax.f32 %v435, %v436
    %v438 = vrot.slane %v392, 4
    %v439 = vmax.f32 %v392, %v438
    %v440 = vrot.slane %v439, 2
    %v441 = vmax.f32 %v439, %v440
    %v442 = vrot.slane %v441, 1
    %v443 = vmax.f32 %v441, %v442
    %v444 = vrot.slane %v393, 4
    %v445 = vmax.f32 %v393, %v444
    %v446 = vrot.slane %v445, 2
    %v447 = vmax.f32 %v445, %v446
    %v448 = vrot.slane %v447, 1
    %v449 = vmax.f32 %v447, %v448
    %v450 = vrot.slane %v394, 4
    %v451 = vmax.f32 %v394, %v450
    %v452 = vrot.slane %v451, 2
    %v453 = vmax.f32 %v451, %v452
    %v454 = vrot.slane %v453, 1
    %v455 = vmax.f32 %v453, %v454
    %v456 = vrot.slane %v395, 4
    %v457 = vmax.f32 %v395, %v456
    %v458 = vrot.slane %v457, 2
    %v459 = vmax.f32 %v457, %v458
    %v460 = vrot.slane %v459, 1
    %v461 = vmax.f32 %v459, %v460
    %v462 = vrot.slane %v396, 4
    %v463 = vmax.f32 %v396, %v462
    %v464 = vrot.slane %v463, 2
    %v465 = vmax.f32 %v463, %v464
    %v466 = vrot.slane %v465, 1
    %v467 = vmax.f32 %v465, %v466
    %v468 = vrot.slane %v397, 4
    %v469 = vmax.f32 %v397, %v468
    %v470 = vrot.slane %v469, 2
    %v471 = vmax.f32 %v469, %v470
    %v472 = vrot.slane %v471, 1
    %v473 = vmax.f32 %v471, %v472
    %v474 = vrot.slane %v398, 4
    %v475 = vmax.f32 %v398, %v474
    %v476 = vrot.slane %v475, 2
    %v477 = vmax.f32 %v475, %v476
    %v478 = vrot.slane %v477, 1
    %v479 = vmax.f32 %v477, %v478
    %v480 = vrot.slane %v399, 4
    %v481 = vmax.f32 %v399, %v480
    %v482 = vrot.slane %v481, 2
    %v483 = vmax.f32 %v481, %v482
    %v484 = vrot.slane %v483, 1
    %v485 = vmax.f32 %v483, %v484
    %v486 = vrot.slane %v400, 4
    %v487 = vmax.f32 %v400, %v486
    %v488 = vrot.slane %v487, 2
    %v489 = vmax.f32 %v487, %v488
    %v490 = vrot.slane %v489, 1
    %v491 = vmax.f32 %v489, %v490
    %v492 = vrot.slane %v401, 4
    %v493 = vmax.f32 %v401, %v492
    %v494 = vrot.slane %v493, 2
    %v495 = vmax.f32 %v493, %v494
    %v496 = vrot.slane %v495, 1
    %v497 = vmax.f32 %v495, %v496
    %v498 = vld [vmem:[#allocation7] sm:$0xff]
    %v499 = vld [vmem:[#allocation7 + $0x8] sm:$0xff]
    %v500 = vld [vmem:[#allocation7 + $0x10] sm:$0xff]
    %v501 = vld [vmem:[#allocation7 + $0x18] sm:$0xff]
    %v502 = vld [vmem:[#allocation7 + $0x20] sm:$0xff]
    %v503 = vld [vmem:[#allocation7 + $0x28] sm:$0xff]
    %v504 = vld [vmem:[#allocation7 + $0x30] sm:$0xff]
    %v505 = vld [vmem:[#allocation7 + $0x38] sm:$0xff]
    %v506 = vld [vmem:[#allocation7 + $0x40] sm:$0xff]
    %v507 = vld [vmem:[#allocation7 + $0x48] sm:$0xff]
    %v508 = vld [vmem:[#allocation7 + $0x50] sm:$0xff]
    %v509 = vld [vmem:[#allocation7 + $0x58] sm:$0xff]
    %v510 = vld [vmem:[#allocation7 + $0x60] sm:$0xff]
    %v511 = vld [vmem:[#allocation7 + $0x68] sm:$0xff]
    %v512 = vld [vmem:[#allocation7 + $0x70] sm:$0xff]
    %v513 = vld [vmem:[#allocation7 + $0x78] sm:$0xff]
    %514 = vmatprep.subr.mxu0 0.0
    %515 = vmatpush1.msra.mxu0 %v498
    %516 = vmatprep.subr.mxu0 0.0
    %517 = vmatpush1.msra.mxu0 %v499
    %518 = vmatprep.subr.mxu0 0.0
    %519 = vmatpush1.msra.mxu0 %v500
    %520 = vmatprep.subr.mxu0 0.0
    %521 = vmatpush1.msra.mxu0 %v501
    %522 = vmatprep.subr.mxu0 0.0
    %523 = vmatpush1.msra.mxu0 %v502
    %524 = vmatprep.subr.mxu0 0.0
    %525 = vmatpush1.msra.mxu0 %v503
    %526 = vmatprep.subr.mxu0 0.0
    %527 = vmatpush1.msra.mxu0 %v504
    %528 = vmatprep.subr.mxu0 0.0
    %529 = vmatpush1.msra.mxu0 %v505
    %530 = vmatprep.subr.mxu0 0.0
    %531 = vmatpush1.msra.mxu0 %v506
    %532 = vmatprep.subr.mxu0 0.0
    %533 = vmatpush1.msra.mxu0 %v507
    %534 = vmatprep.subr.mxu0 0.0
    %535 = vmatpush1.msra.mxu0 %v508
    %536 = vmatprep.subr.mxu0 0.0
    %537 = vmatpush1.msra.mxu0 %v509
    %538 = vmatprep.subr.mxu0 0.0
    %539 = vmatpush1.msra.mxu0 %v510
    %540 = vmatprep.subr.mxu0 0.0
    %541 = vmatpush1.msra.mxu0 %v511
    %542 = vmatprep.subr.mxu0 0.0
    %543 = vmatpush1.msra.mxu0 %v512
    %544 = vmatprep.subr.mxu0 0.0
    %545 = vmatpush1.msra.mxu0 %v513
    %546 = vmatprep.subr.mxu0 0.0
    %547 = vmatpush1.msra.mxu0 0.0
    %548 = vmatprep.subr.mxu0 0.0
    %549 = vmatpush1.msra.mxu0 0.0
    %550 = vmatprep.subr.mxu0 0.0
    %551 = vmatpush1.msra.mxu0 0.0
    %552 = vmatprep.subr.mxu0 0.0
    %553 = vmatpush1.msra.mxu0 0.0
    %554 = vmatprep.subr.mxu0 0.0
    %555 = vmatpush1.msra.mxu0 0.0
    %556 = vmatprep.subr.mxu0 0.0
    %557 = vmatpush1.msra.mxu0 0.0
    %558 = vmatprep.subr.mxu0 0.0
    %559 = vmatpush1.msra.mxu0 0.0
    %560 = vmatprep.subr.mxu0 0.0
    %561 = vmatpush1.msra.mxu0 0.0
    %562 = vmatprep.subr.mxu0 0.0
    %563 = vmatpush1.msra.mxu0 0.0
    %564 = vmatprep.subr.mxu0 0.0
    %565 = vmatpush1.msra.mxu0 0.0
    %566 = vmatprep.subr.mxu0 0.0
    %567 = vmatpush1.msra.mxu0 0.0
    %568 = vmatprep.subr.mxu0 0.0
    %569 = vmatpush1.msra.mxu0 0.0
    %570 = vmatprep.subr.mxu0 0.0
    %571 = vmatpush1.msra.mxu0 0.0
    %572 = vmatprep.subr.mxu0 0.0
    %573 = vmatpush1.msra.mxu0 0.0
    %574 = vmatprep.subr.mxu0 0.0
    %575 = vmatpush1.msra.mxu0 0.0
    %576 = vmatprep.subr.mxu0 0.0
    %577 = vmatpush1.msra.mxu0 0.0
    %578 = vmatprep.mubr.f32.mxu0 0.0
    %579 = vmatmul.mubr.f32.gmra.mrb[0].mxu0 %v386
    %v580 = vpop.f32.mrb[0].mxu0
    %v581 = vadd.f32 0.0, %v580
    %v582 = vpop.f32.mrb[0].mxu0
    %583 = vmatprep.mubr.f32.mxu0 0.0
    %584 = vmatmul.mubr.f32.gmra.mrb[0].mxu0 %v387
    %v585 = vpop.f32.mrb[0].mxu0
    %v586 = vadd.f32 0.0, %v585
    %v587 = vpop.f32.mrb[0].mxu0
    %588 = vmatprep.mubr.f32.mxu0 0.0
    %589 = vmatmul.mubr.f32.gmra.mrb[0].mxu0 %v388
    %v590 = vpop.f32.mrb[0].mxu0
    %v591 = vadd.f32 0.0, %v590
    %v592 = vpop.f32.mrb[0].mxu0
    %593 = vmatprep.mubr.f32.mxu0 0.0
    %594 = vmatmul.mubr.f32.gmra.mrb[0].mxu0 %v389
    %v595 = vpop.f32.mrb[0].mxu0
    %v596 = vadd.f32 0.0, %v595
    %v597 = vpop.f32.mrb[0].mxu0
    %598 = vmatprep.mubr.f32.mxu0 0.0
    %599 = vmatmul.mubr.f32.gmra.mrb[0].mxu0 %v390
    %v600 = vpop.f32.mrb[0].mxu0
    %v601 = vadd.f32 0.0, %v600
    %v602 = vpop.f32.mrb[0].mxu0
    %603 = vmatprep.mubr.f32.mxu0 0.0
    %604 = vmatmul.mubr.f32.gmra.mrb[0].mxu0 %v391
    %v605 = vpop.f32.mrb[0].mxu0
    %v606 = vadd.f32 0.0, %v605
    %v607 = vpop.f32.mrb[0].mxu0
    %608 = vmatprep.mubr.f32.mxu0 0.0
    %609 = vmatmul.mubr.f32.gmra.mrb[0].mxu0 %v392
    %v610 = vpop.f32.mrb[0].mxu0
    %v611 = vadd.f32 0.0, %v610
    %v612 = vpop.f32.mrb[0].mxu0
    %613 = vmatprep.mubr.f32.mxu0 0.0
    %614 = vmatmul.mubr.f32.gmra.mrb[0].mxu0 %v393
    %v615 = vpop.f32.mrb[0].mxu0
    %v616 = vadd.f32 0.0, %v615
    %v617 = vpop.f32.mrb[0].mxu0
    %618 = vmatprep.mubr.f32.mxu0 0.0
    %619 = vmatmul.mubr.f32.gmra.mrb[0].mxu0 %v394
    %v620 = vpop.f32.mrb[0].mxu0
    %v621 = vadd.f32 0.0, %v620
    %v622 = vpop.f32.mrb[0].mxu0
    %623 = vmatprep.mubr.f32.mxu0 0.0
    %624 = vmatmul.mubr.f32.gmra.mrb[0].mxu0 %v395
    %v625 = vpop.f32.mrb[0].mxu0
    %v626 = vadd.f32 0.0, %v625
    %v627 = vpop.f32.mrb[0].mxu0
    %628 = vmatprep.mubr.f32.mxu0 0.0
    %629 = vmatmul.mubr.f32.gmra.mrb[0].mxu0 %v396
    %v630 = vpop.f32.mrb[0].mxu0
    %v631 = vadd.f32 0.0, %v630
    %v632 = vpop.f32.mrb[0].mxu0
    %633 = vmatprep.mubr.f32.mxu0 0.0
    %634 = vmatmul.mubr.f32.gmra.mrb[0].mxu0 %v397
    %v635 = vpop.f32.mrb[0].mxu0
    %v636 = vadd.f32 0.0, %v635
    %v637 = vpop.f32.mrb[0].mxu0
    %638 = vmatprep.mubr.f32.mxu0 0.0
    %639 = vmatmul.mubr.f32.gmra.mrb[0].mxu0 %v398
    %v640 = vpop.f32.mrb[0].mxu0
    %v641 = vadd.f32 0.0, %v640
    %v642 = vpop.f32.mrb[0].mxu0
    %643 = vmatprep.mubr.f32.mxu0 0.0
    %644 = vmatmul.mubr.f32.gmra.mrb[0].mxu0 %v399
    %v645 = vpop.f32.mrb[0].mxu0
    %v646 = vadd.f32 0.0, %v645
    %v647 = vpop.f32.mrb[0].mxu0
    %648 = vmatprep.mubr.f32.mxu0 0.0
    %649 = vmatmul.mubr.f32.gmra.mrb[0].mxu0 %v400
    %v650 = vpop.f32.mrb[0].mxu0
    %v651 = vadd.f32 0.0, %v650
    %v652 = vpop.f32.mrb[0].mxu0
    %653 = vmatprep.mubr.f32.mxu0 0.0
    %654 = vmatmul.mubr.f32.gmra.mrb[0].mxu0 %v401
    %v655 = vpop.f32.mrb[0].mxu0
    %v656 = vadd.f32 0.0, %v655
    %v657 = vpop.f32.mrb[0].mxu0
    %658 = vdwg.mxu0
    %v659 = vld [vmem:[#allocation8] sm:$0xff]
    %v660 = vld [vmem:[#allocation8 + $0x8] sm:$0xff]
    %v661 = vld [vmem:[#allocation8 + $0x10] sm:$0xff]
    %v662 = vld [vmem:[#allocation8 + $0x18] sm:$0xff]
    %v663 = vld [vmem:[#allocation8 + $0x20] sm:$0xff]
    %v664 = vld [vmem:[#allocation8 + $0x28] sm:$0xff]
    %v665 = vld [vmem:[#allocation8 + $0x30] sm:$0xff]
    %v666 = vld [vmem:[#allocation8 + $0x38] sm:$0xff]
    %v667 = vld [vmem:[#allocation8 + $0x40] sm:$0xff]
    %v668 = vld [vmem:[#allocation8 + $0x48] sm:$0xff]
    %v669 = vld [vmem:[#allocation8 + $0x50] sm:$0xff]
    %v670 = vld [vmem:[#allocation8 + $0x58] sm:$0xff]
    %v671 = vld [vmem:[#allocation8 + $0x60] sm:$0xff]
    %v672 = vld [vmem:[#allocation8 + $0x68] sm:$0xff]
    %v673 = vld [vmem:[#allocation8 + $0x70] sm:$0xff]
    %v674 = vld [vmem:[#allocation8 + $0x78] sm:$0xff]
    %v675 = vld [vmem:[%s5] sm:$0x1]
    %v677 = vlaneseq
    %v678 = vshrl.u32 %v677, 7
    %v679 = vsub.s32 0, %v678
    %v680 = vrot.slane %v675, %v679
    %vm698 = vcmask 1041409
    %v699 = vsel %vm698, %v413, %v407
    %vm700 = vcmask 1042434
    %v701 = vsel %vm700, %v419, %v699
    %vm702 = vcmask 1043459
    %v703 = vsel %vm702, %v425, %v701
    %vm704 = vcmask 1044484
    %v705 = vsel %vm704, %v431, %v703
    %vm706 = vcmask 1045509
    %v707 = vsel %vm706, %v437, %v705
    %vm708 = vcmask 1046534
    %v709 = vsel %vm708, %v443, %v707
    %vm710 = vcmask 1047559
    %v711 = vsel %vm710, %v449, %v709
    %v712 = vsel %vm698, %v461, %v455
    %v713 = vsel %vm700, %v467, %v712
    %v714 = vsel %vm702, %v473, %v713
    %v715 = vsel %vm704, %v479, %v714
    %v716 = vsel %vm706, %v485, %v715
    %v717 = vsel %vm708, %v491, %v716
    %v718 = vsel %vm710, %v497, %v717
    %721 = vmatprep.subr.mxu0 0.0
    %722 = vmatpush1.msra.mxu0 %v659
    %723 = vmatprep.subr.mxu0 0.0
    %724 = vmatpush1.msra.mxu0 %v660
    %725 = vmatprep.subr.mxu0 0.0
    %726 = vmatpush1.msra.mxu0 %v661
    %727 = vmatprep.subr.mxu0 0.0
    %728 = vmatpush1.msra.mxu0 %v662
    %729 = vmatprep.subr.mxu0 0.0
    %730 = vmatpush1.msra.mxu0 %v663
    %731 = vmatprep.subr.mxu0 0.0
    %732 = vmatpush1.msra.mxu0 %v664
    %733 = vmatprep.subr.mxu0 0.0
    %734 = vmatpush1.msra.mxu0 %v665
    %735 = vmatprep.subr.mxu0 0.0
    %736 = vmatpush1.msra.mxu0 %v666
    %737 = vmatprep.subr.mxu0 0.0
    %738 = vmatpush1.msra.mxu0 %v667
    %739 = vmatprep.subr.mxu0 0.0
    %740 = vmatpush1.msra.mxu0 %v668
    %741 = vmatprep.subr.mxu0 0.0
    %742 = vmatpush1.msra.mxu0 %v669
    %743 = vmatprep.subr.mxu0 0.0
    %744 = vmatpush1.msra.mxu0 %v670
    %745 = vmatprep.subr.mxu0 0.0
    %746 = vmatpush1.msra.mxu0 %v671
    %747 = vmatprep.subr.mxu0 0.0
    %748 = vmatpush1.msra.mxu0 %v672
    %749 = vmatprep.subr.mxu0 0.0
    %750 = vmatpush1.msra.mxu0 %v673
    %751 = vmatprep.subr.mxu0 0.0
    %752 = vmatpush1.msra.mxu0 %v674
    %753 = vmatprep.subr.mxu0 0.0
    %754 = vmatpush1.msra.mxu0 0.0
    %755 = vmatprep.subr.mxu0 0.0
    %756 = vmatpush1.msra.mxu0 0.0
    %757 = vmatprep.subr.mxu0 0.0
    %758 = vmatpush1.msra.mxu0 0.0
    %759 = vmatprep.subr.mxu0 0.0
    %760 = vmatpush1.msra.mxu0 0.0
    %761 = vmatprep.subr.mxu0 0.0
    %762 = vmatpush1.msra.mxu0 0.0
    %763 = vmatprep.subr.mxu0 0.0
    %764 = vmatpush1.msra.mxu0 0.0
    %765 = vmatprep.subr.mxu0 0.0
    %766 = vmatpush1.msra.mxu0 0.0
    %767 = vmatprep.subr.mxu0 0.0
    %768 = vmatpush1.msra.mxu0 0.0
    %769 = vmatprep.subr.mxu0 0.0
    %770 = vmatpush1.msra.mxu0 0.0
    %771 = vmatprep.subr.mxu0 0.0
    %772 = vmatpush1.msra.mxu0 0.0
    %773 = vmatprep.subr.mxu0 0.0
    %774 = vmatpush1.msra.mxu0 0.0
    %775 = vmatprep.subr.mxu0 0.0
    %776 = vmatpush1.msra.mxu0 0.0
    %777 = vmatprep.subr.mxu0 0.0
    %778 = vmatpush1.msra.mxu0 0.0
    %779 = vmatprep.subr.mxu0 0.0
    %780 = vmatpush1.msra.mxu0 0.0
    %781 = vmatprep.subr.mxu0 0.0
    %782 = vmatpush1.msra.mxu0 0.0
    %783 = vmatprep.subr.mxu0 0.0
    %784 = vmatpush1.msra.mxu0 0.0
    %785 = vmatprep.mubr.f32.mxu0 0.0
    %786 = vmatmul.mubr.f32.gmra.mrb[0].mxu0 %v711
    %v787 = vpop.f32.mrb[0].mxu0
    %v788 = vadd.f32 %v680, %v787
    %v789 = vpop.f32.mrb[0].mxu0
    %790 = vmatprep.mubr.f32.mxu0 0.0
    %791 = vmatmul.mubr.f32.gmra.mrb[0].mxu0 %v718
    %v792 = vpop.f32.mrb[0].mxu0
    %v793 = vadd.f32 %v680, %v792
    %v794 = vpop.f32.mrb[0].mxu0
    %795 = vdwg.mxu0
    %v798 = vcombine.high %v788, %v788
    %v800 = vunpack.c.l.s4 1966171168
    %v801 = vunpack.c.0.s8 %v800
    %v802 = vlaneseq
    %v803 = vshrl.u32 %v802, 7
    %v804 = vsub.s32 %v801, %v803
    %v805 = vrot.slane %v788, %v804
    %v807 = vunpack.c.l.s4 1966171168
    %v808 = vunpack.c.0.s8 %v807
    %v809 = vlaneseq
    %v810 = vshrl.u32 %v809, 7
    %v811 = vsub.s32 %v808, %v810
    %v812 = vrot.slane %v798, %v811
    %v813 = vcombine.high %v805, %v805
    %v814 = vcombine.high %v812, %v812
    %v816 = vunpack.c.l.s4 1966171168
    %v817 = vunpack.c.0.s8 %v816
    %v818 = vlaneseq
    %v819 = vshrl.u32 %v818, 7
    %v820 = vsub.s32 %v817, %v819
    %v821 = vrot.slane %v805, %v820
    %v823 = vunpack.c.l.s4 1966171168
    %v824 = vunpack.c.0.s8 %v823
    %v825 = vlaneseq
    %v826 = vshrl.u32 %v825, 7
    %v827 = vsub.s32 %v824, %v826
    %v828 = vrot.slane %v812, %v827
    %v830 = vunpack.c.l.s4 1966171168
    %v831 = vunpack.c.0.s8 %v830
    %v832 = vlaneseq
    %v833 = vshrl.u32 %v832, 7
    %v834 = vsub.s32 %v831, %v833
    %v835 = vrot.slane %v813, %v834
    %v837 = vunpack.c.l.s4 1966171168
    %v838 = vunpack.c.0.s8 %v837
    %v839 = vlaneseq
    %v840 = vshrl.u32 %v839, 7
    %v841 = vsub.s32 %v838, %v840
    %v842 = vrot.slane %v814, %v841
    %v843 = vcombine.high %v821, %v821
    %v844 = vcombine.high %v828, %v828
    %v845 = vcombine.high %v835, %v835
    %v846 = vcombine.high %v842, %v842
    %v847 = vcombine.high %v793, %v793
    %v849 = vunpack.c.l.s4 1966171168
    %v850 = vunpack.c.0.s8 %v849
    %v851 = vlaneseq
    %v852 = vshrl.u32 %v851, 7
    %v853 = vsub.s32 %v850, %v852
    %v854 = vrot.slane %v793, %v853
    %v856 = vunpack.c.l.s4 1966171168
    %v857 = vunpack.c.0.s8 %v856
    %v858 = vlaneseq
    %v859 = vshrl.u32 %v858, 7
    %v860 = vsub.s32 %v857, %v859
    %v861 = vrot.slane %v847, %v860
    %v862 = vcombine.high %v854, %v854
    %v863 = vcombine.high %v861, %v861
    %v865 = vunpack.c.l.s4 1966171168
    %v866 = vunpack.c.0.s8 %v865
    %v867 = vlaneseq
    %v868 = vshrl.u32 %v867, 7
    %v869 = vsub.s32 %v866, %v868
    %v870 = vrot.slane %v854, %v869
    %v872 = vunpack.c.l.s4 1966171168
    %v873 = vunpack.c.0.s8 %v872
    %v874 = vlaneseq
    %v875 = vshrl.u32 %v874, 7
    %v876 = vsub.s32 %v873, %v875
    %v877 = vrot.slane %v861, %v876
    %v879 = vunpack.c.l.s4 1966171168
    %v880 = vunpack.c.0.s8 %v879
    %v881 = vlaneseq
    %v882 = vshrl.u32 %v881, 7
    %v883 = vsub.s32 %v880, %v882
    %v884 = vrot.slane %v862, %v883
    %v886 = vunpack.c.l.s4 1966171168
    %v887 = vunpack.c.0.s8 %v886
    %v888 = vlaneseq
    %v889 = vshrl.u32 %v888, 7
    %v890 = vsub.s32 %v887, %v889
    %v891 = vrot.slane %v863, %v890
    %v892 = vcombine.high %v870, %v870
    %v893 = vcombine.high %v877, %v877
    %v894 = vcombine.high %v884, %v884
    %v895 = vcombine.high %v891, %v891
    %v896 = vlaneseq
    %v897 = vshrl.u32 %v896, 7
    %v898 = vsub.s32 0, %v897
    %v899 = vrot.slane %v821, %v898
    %v900 = vlaneseq
    %v901 = vshrl.u32 %v900, 7
    %v902 = vsub.s32 0, %v901
    %v903 = vrot.slane %v835, %v902
    %v904 = vlaneseq
    %v905 = vshrl.u32 %v904, 7
    %v906 = vsub.s32 0, %v905
    %v907 = vrot.slane %v843, %v906
    %v908 = vlaneseq
    %v909 = vshrl.u32 %v908, 7
    %v910 = vsub.s32 0, %v909
    %v911 = vrot.slane %v845, %v910
    %v912 = vlaneseq
    %v913 = vshrl.u32 %v912, 7
    %v914 = vsub.s32 0, %v913
    %v915 = vrot.slane %v828, %v914
    %v916 = vlaneseq
    %v917 = vshrl.u32 %v916, 7
    %v918 = vsub.s32 0, %v917
    %v919 = vrot.slane %v842, %v918
    %v920 = vlaneseq
    %v921 = vshrl.u32 %v920, 7
    %v922 = vsub.s32 0, %v921
    %v923 = vrot.slane %v844, %v922
    %v924 = vlaneseq
    %v925 = vshrl.u32 %v924, 7
    %v926 = vsub.s32 0, %v925
    %v927 = vrot.slane %v846, %v926
    %v928 = vlaneseq
    %v929 = vshrl.u32 %v928, 7
    %v930 = vsub.s32 0, %v929
    %v931 = vrot.slane %v870, %v930
    %v932 = vlaneseq
    %v933 = vshrl.u32 %v932, 7
    %v934 = vsub.s32 0, %v933
    %v935 = vrot.slane %v884, %v934
    %v936 = vlaneseq
    %v937 = vshrl.u32 %v936, 7
    %v938 = vsub.s32 0, %v937
    %v939 = vrot.slane %v892, %v938
    %v940 = vlaneseq
    %v941 = vshrl.u32 %v940, 7
    %v942 = vsub.s32 0, %v941
    %v943 = vrot.slane %v894, %v942
    %v944 = vlaneseq
    %v945 = vshrl.u32 %v944, 7
    %v946 = vsub.s32 0, %v945
    %v947 = vrot.slane %v877, %v946
    %v948 = vlaneseq
    %v949 = vshrl.u32 %v948, 7
    %v950 = vsub.s32 0, %v949
    %v951 = vrot.slane %v891, %v950
    %v952 = vlaneseq
    %v953 = vshrl.u32 %v952, 7
    %v954 = vsub.s32 0, %v953
    %v955 = vrot.slane %v893, %v954
    %v956 = vlaneseq
    %v957 = vshrl.u32 %v956, 7
    %v958 = vsub.s32 0, %v957
    %v959 = vrot.slane %v895, %v958
    %v976 = vadd.f32 %v581, %v899
    %v977 = vadd.f32 %v586, %v903
    %v978 = vadd.f32 %v591, %v907
    %v979 = vadd.f32 %v596, %v911
    %v980 = vadd.f32 %v601, %v915
    %v981 = vadd.f32 %v606, %v919
    %v982 = vadd.f32 %v611, %v923
    %v983 = vadd.f32 %v616, %v927
    %v984 = vadd.f32 %v621, %v931
    %v985 = vadd.f32 %v626, %v935
    %v986 = vadd.f32 %v631, %v939
    %v987 = vadd.f32 %v636, %v943
    %v988 = vadd.f32 %v641, %v947
    %v989 = vadd.f32 %v646, %v951
    %v990 = vadd.f32 %v651, %v955
    %v991 = vadd.f32 %v656, %v959
    %v992 = vmax.f32 %v976, 0.0
    %v993 = vmax.f32 %v977, 0.0
    %v994 = vmax.f32 %v978, 0.0
    %v995 = vmax.f32 %v979, 0.0
    %v996 = vmax.f32 %v980, 0.0
    %v997 = vmax.f32 %v981, 0.0
    %v998 = vmax.f32 %v982, 0.0
    %v999 = vmax.f32 %v983, 0.0
    %v1000 = vmax.f32 %v984, 0.0
    %v1001 = vmax.f32 %v985, 0.0
    %v1002 = vmax.f32 %v986, 0.0
    %v1003 = vmax.f32 %v987, 0.0
    %v1004 = vmax.f32 %v988, 0.0
    %v1005 = vmax.f32 %v989, 0.0
    %v1006 = vmax.f32 %v990, 0.0
    %v1007 = vmax.f32 %v991, 0.0
    %v1008 = vrot.slane %v992, 4
    %v1009 = vmax.f32 %v992, %v1008
    %v1010 = vrot.slane %v1009, 2
    %v1011 = vmax.f32 %v1009, %v1010
    %v1012 = vrot.slane %v1011, 1
    %v1013 = vmax.f32 %v1011, %v1012
    %v1014 = vrot.slane %v993, 4
    %v1015 = vmax.f32 %v993, %v1014
    %v1016 = vrot.slane %v1015, 2
    %v1017 = vmax.f32 %v1015, %v1016
    %v1018 = vrot.slane %v1017, 1
    %v1019 = vmax.f32 %v1017, %v1018
    %v1020 = vrot.slane %v994, 4
    %v1021 = vmax.f32 %v994, %v1020
    %v1022 = vrot.slane %v1021, 2
    %v1023 = vmax.f32 %v1021, %v1022
    %v1024 = vrot.slane %v1023, 1
    %v1025 = vmax.f32 %v1023, %v1024
    %v1026 = vrot.slane %v995, 4
    %v1027 = vmax.f32 %v995, %v1026
    %v1028 = vrot.slane %v1027, 2
    %v1029 = vmax.f32 %v1027, %v1028
    %v1030 = vrot.slane %v1029, 1
    %v1031 = vmax.f32 %v1029, %v1030
    %v1032 = vrot.slane %v996, 4
    %v1033 = vmax.f32 %v996, %v1032
    %v1034 = vrot.slane %v1033, 2
    %v1035 = vmax.f32 %v1033, %v1034
    %v1036 = vrot.slane %v1035, 1
    %v1037 = vmax.f32 %v1035, %v1036
    %v1038 = vrot.slane %v997, 4
    %v1039 = vmax.f32 %v997, %v1038
    %v1040 = vrot.slane %v1039, 2
    %v1041 = vmax.f32 %v1039, %v1040
    %v1042 = vrot.slane %v1041, 1
    %v1043 = vmax.f32 %v1041, %v1042
    %v1044 = vrot.slane %v998, 4
    %v1045 = vmax.f32 %v998, %v1044
    %v1046 = vrot.slane %v1045, 2
    %v1047 = vmax.f32 %v1045, %v1046
    %v1048 = vrot.slane %v1047, 1
    %v1049 = vmax.f32 %v1047, %v1048
    %v1050 = vrot.slane %v999, 4
    %v1051 = vmax.f32 %v999, %v1050
    %v1052 = vrot.slane %v1051, 2
    %v1053 = vmax.f32 %v1051, %v1052
    %v1054 = vrot.slane %v1053, 1
    %v1055 = vmax.f32 %v1053, %v1054
    %v1056 = vrot.slane %v1000, 4
    %v1057 = vmax.f32 %v1000, %v1056
    %v1058 = vrot.slane %v1057, 2
    %v1059 = vmax.f32 %v1057, %v1058
    %v1060 = vrot.slane %v1059, 1
    %v1061 = vmax.f32 %v1059, %v1060
    %v1062 = vrot.slane %v1001, 4
    %v1063 = vmax.f32 %v1001, %v1062
    %v1064 = vrot.slane %v1063, 2
    %v1065 = vmax.f32 %v1063, %v1064
    %v1066 = vrot.slane %v1065, 1
    %v1067 = vmax.f32 %v1065, %v1066
    %v1068 = vrot.slane %v1002, 4
    %v1069 = vmax.f32 %v1002, %v1068
    %v1070 = vrot.slane %v1069, 2
    %v1071 = vmax.f32 %v1069, %v1070
    %v1072 = vrot.slane %v1071, 1
    %v1073 = vmax.f32 %v1071, %v1072
    %v1074 = vrot.slane %v1003, 4
    %v1075 = vmax.f32 %v1003, %v1074
    %v1076 = vrot.slane %v1075, 2
    %v1077 = vmax.f32 %v1075, %v1076
    %v1078 = vrot.slane %v1077, 1
    %v1079 = vmax.f32 %v1077, %v1078
    %v1080 = vrot.slane %v1004, 4
    %v1081 = vmax.f32 %v1004, %v1080
    %v1082 = vrot.slane %v1081, 2
    %v1083 = vmax.f32 %v1081, %v1082
    %v1084 = vrot.slane %v1083, 1
    %v1085 = vmax.f32 %v1083, %v1084
    %v1086 = vrot.slane %v1005, 4
    %v1087 = vmax.f32 %v1005, %v1086
    %v1088 = vrot.slane %v1087, 2
    %v1089 = vmax.f32 %v1087, %v1088
    %v1090 = vrot.slane %v1089, 1
    %v1091 = vmax.f32 %v1089, %v1090
    %v1092 = vrot.slane %v1006, 4
    %v1093 = vmax.f32 %v1006, %v1092
    %v1094 = vrot.slane %v1093, 2
    %v1095 = vmax.f32 %v1093, %v1094
    %v1096 = vrot.slane %v1095, 1
    %v1097 = vmax.f32 %v1095, %v1096
    %v1098 = vrot.slane %v1007, 4
    %v1099 = vmax.f32 %v1007, %v1098
    %v1100 = vrot.slane %v1099, 2
    %v1101 = vmax.f32 %v1099, %v1100
    %v1102 = vrot.slane %v1101, 1
    %v1103 = vmax.f32 %v1101, %v1102
    %v1104 = vld [vmem:[#allocation10] sm:$0xff]
    %v1105 = vld [vmem:[#allocation10 + $0x8] sm:$0xff]
    %v1106 = vld [vmem:[#allocation10 + $0x10] sm:$0xff]
    %v1107 = vld [vmem:[#allocation10 + $0x18] sm:$0xff]
    %v1108 = vld [vmem:[#allocation10 + $0x20] sm:$0xff]
    %v1109 = vld [vmem:[#allocation10 + $0x28] sm:$0xff]
    %v1110 = vld [vmem:[#allocation10 + $0x30] sm:$0xff]
    %v1111 = vld [vmem:[#allocation10 + $0x38] sm:$0xff]
    %v1112 = vld [vmem:[#allocation10 + $0x40] sm:$0xff]
    %v1113 = vld [vmem:[#allocation10 + $0x48] sm:$0xff]
    %v1114 = vld [vmem:[#allocation10 + $0x50] sm:$0xff]
    %v1115 = vld [vmem:[#allocation10 + $0x58] sm:$0xff]
    %v1116 = vld [vmem:[#allocation10 + $0x60] sm:$0xff]
    %v1117 = vld [vmem:[#allocation10 + $0x68] sm:$0xff]
    %v1118 = vld [vmem:[#allocation10 + $0x70] sm:$0xff]
    %v1119 = vld [vmem:[#allocation10 + $0x78] sm:$0xff]
    %1120 = vmatprep.subr.mxu0 0.0
    %1121 = vmatpush1.msra.mxu0 %v1104
    %1122 = vmatprep.subr.mxu0 0.0
    %1123 = vmatpush1.msra.mxu0 %v1105
    %1124 = vmatprep.subr.mxu0 0.0
    %1125 = vmatpush1.msra.mxu0 %v1106
    %1126 = vmatprep.subr.mxu0 0.0
    %1127 = vmatpush1.msra.mxu0 %v1107
    %1128 = vmatprep.subr.mxu0 0.0
    %1129 = vmatpush1.msra.mxu0 %v1108
    %1130 = vmatprep.subr.mxu0 0.0
    %1131 = vmatpush1.msra.mxu0 %v1109
    %1132 = vmatprep.subr.mxu0 0.0
    %1133 = vmatpush1.msra.mxu0 %v1110
    %1134 = vmatprep.subr.mxu0 0.0
    %1135 = vmatpush1.msra.mxu0 %v1111
    %1136 = vmatprep.subr.mxu0 0.0
    %1137 = vmatpush1.msra.mxu0 %v1112
    %1138 = vmatprep.subr.mxu0 0.0
    %1139 = vmatpush1.msra.mxu0 %v1113
    %1140 = vmatprep.subr.mxu0 0.0
    %1141 = vmatpush1.msra.mxu0 %v1114
    %1142 = vmatprep.subr.mxu0 0.0
    %1143 = vmatpush1.msra.mxu0 %v1115
    %1144 = vmatprep.subr.mxu0 0.0
    %1145 = vmatpush1.msra.mxu0 %v1116
    %1146 = vmatprep.subr.mxu0 0.0
    %1147 = vmatpush1.msra.mxu0 %v1117
    %1148 = vmatprep.subr.mxu0 0.0
    %1149 = vmatpush1.msra.mxu0 %v1118
    %1150 = vmatprep.subr.mxu0 0.0
    %1151 = vmatpush1.msra.mxu0 %v1119
    %1152 = vmatprep.subr.mxu0 0.0
    %1153 = vmatpush1.msra.mxu0 0.0
    %1154 = vmatprep.subr.mxu0 0.0
    %1155 = vmatpush1.msra.mxu0 0.0
    %1156 = vmatprep.subr.mxu0 0.0
    %1157 = vmatpush1.msra.mxu0 0.0
    %1158 = vmatprep.subr.mxu0 0.0
    %1159 = vmatpush1.msra.mxu0 0.0
    %1160 = vmatprep.subr.mxu0 0.0
    %1161 = vmatpush1.msra.mxu0 0.0
    %1162 = vmatprep.subr.mxu0 0.0
    %1163 = vmatpush1.msra.mxu0 0.0
    %1164 = vmatprep.subr.mxu0 0.0
    %1165 = vmatpush1.msra.mxu0 0.0
    %1166 = vmatprep.subr.mxu0 0.0
    %1167 = vmatpush1.msra.mxu0 0.0
    %1168 = vmatprep.subr.mxu0 0.0
    %1169 = vmatpush1.msra.mxu0 0.0
    %1170 = vmatprep.subr.mxu0 0.0
    %1171 = vmatpush1.msra.mxu0 0.0
    %1172 = vmatprep.subr.mxu0 0.0
    %1173 = vmatpush1.msra.mxu0 0.0
    %1174 = vmatprep.subr.mxu0 0.0
    %1175 = vmatpush1.msra.mxu0 0.0
    %1176 = vmatprep.subr.mxu0 0.0
    %1177 = vmatpush1.msra.mxu0 0.0
    %1178 = vmatprep.subr.mxu0 0.0
    %1179 = vmatpush1.msra.mxu0 0.0
    %1180 = vmatprep.subr.mxu0 0.0
    %1181 = vmatpush1.msra.mxu0 0.0
    %1182 = vmatprep.subr.mxu0 0.0
    %1183 = vmatpush1.msra.mxu0 0.0
    %1184 = vmatprep.mubr.f32.mxu0 0.0
    %1185 = vmatmul.mubr.f32.gmra.mrb[0].mxu0 %v992
    %v1186 = vpop.f32.mrb[0].mxu0
    %v1187 = vadd.f32 0.0, %v1186
    %v1188 = vpop.f32.mrb[0].mxu0
    %1189 = vmatprep.mubr.f32.mxu0 0.0
    %1190 = vmatmul.mubr.f32.gmra.mrb[0].mxu0 %v993
    %v1191 = vpop.f32.mrb[0].mxu0
    %v1192 = vadd.f32 0.0, %v1191
    %v1193 = vpop.f32.mrb[0].mxu0
    %1194 = vmatprep.mubr.f32.mxu0 0.0
    %1195 = vmatmul.mubr.f32.gmra.mrb[0].mxu0 %v994
    %v1196 = vpop.f32.mrb[0].mxu0
    %v1197 = vadd.f32 0.0, %v1196
    %v1198 = vpop.f32.mrb[0].mxu0
    %1199 = vmatprep.mubr.f32.mxu0 0.0
    %1200 = vmatmul.mubr.f32.gmra.mrb[0].mxu0 %v995
    %v1201 = vpop.f32.mrb[0].mxu0
    %v1202 = vadd.f32 0.0, %v1201
    %v1203 = vpop.f32.mrb[0].mxu0
    %1204 = vmatprep.mubr.f32.mxu0 0.0
    %1205 = vmatmul.mubr.f32.gmra.mrb[0].mxu0 %v996
    %v1206 = vpop.f32.mrb[0].mxu0
    %v1207 = vadd.f32 0.0, %v1206
    %v1208 = vpop.f32.mrb[0].mxu0
    %1209 = vmatprep.mubr.f32.mxu0 0.0
    %1210 = vmatmul.mubr.f32.gmra.mrb[0].mxu0 %v997
    %v1211 = vpop.f32.mrb[0].mxu0
    %v1212 = vadd.f32 0.0, %v1211
    %v1213 = vpop.f32.mrb[0].mxu0
    %1214 = vmatprep.mubr.f32.mxu0 0.0
    %1215 = vmatmul.mubr.f32.gmra.mrb[0].mxu0 %v998
    %v1216 = vpop.f32.mrb[0].mxu0
    %v1217 = vadd.f32 0.0, %v1216
    %v1218 = vpop.f32.mrb[0].mxu0
    %1219 = vmatprep.mubr.f32.mxu0 0.0
    %1220 = vmatmul.mubr.f32.gmra.mrb[0].mxu0 %v999
    %v1221 = vpop.f32.mrb[0].mxu0
    %v1222 = vadd.f32 0.0, %v1221
    %v1223 = vpop.f32.mrb[0].mxu0
    %1224 = vmatprep.mubr.f32.mxu0 0.0
    %1225 = vmatmul.mubr.f32.gmra.mrb[0].mxu0 %v1000
    %v1226 = vpop.f32.mrb[0].mxu0
    %v1227 = vadd.f32 0.0, %v1226
    %v1228 = vpop.f32.mrb[0].mxu0
    %1229 = vmatprep.mubr.f32.mxu0 0.0
    %1230 = vmatmul.mubr.f32.gmra.mrb[0].mxu0 %v1001
    %v1231 = vpop.f32.mrb[0].mxu0
    %v1232 = vadd.f32 0.0, %v1231
    %v1233 = vpop.f32.mrb[0].mxu0
    %1234 = vmatprep.mubr.f32.mxu0 0.0
    %1235 = vmatmul.mubr.f32.gmra.mrb[0].mxu0 %v1002
    %v1236 = vpop.f32.mrb[0].mxu0
    %v1237 = vadd.f32 0.0, %v1236
    %v1238 = vpop.f32.mrb[0].mxu0
    %1239 = vmatprep.mubr.f32.mxu0 0.0
    %1240 = vmatmul.mubr.f32.gmra.mrb[0].mxu0 %v1003
    %v1241 = vpop.f32.mrb[0].mxu0
    %v1242 = vadd.f32 0.0, %v1241
    %v1243 = vpop.f32.mrb[0].mxu0
    %1244 = vmatprep.mubr.f32.mxu0 0.0
    %1245 = vmatmul.mubr.f32.gmra.mrb[0].mxu0 %v1004
    %v1246 = vpop.f32.mrb[0].mxu0
    %v1247 = vadd.f32 0.0, %v1246
    %v1248 = vpop.f32.mrb[0].mxu0
    %1249 = vmatprep.mubr.f32.mxu0 0.0
    %1250 = vmatmul.mubr.f32.gmra.mrb[0].mxu0 %v1005
    %v1251 = vpop.f32.mrb[0].mxu0
    %v1252 = vadd.f32 0.0, %v1251
    %v1253 = vpop.f32.mrb[0].mxu0
    %1254 = vmatprep.mubr.f32.mxu0 0.0
    %1255 = vmatmul.mubr.f32.gmra.mrb[0].mxu0 %v1006
    %v1256 = vpop.f32.mrb[0].mxu0
    %v1257 = vadd.f32 0.0, %v1256
    %v1258 = vpop.f32.mrb[0].mxu0
    %1259 = vmatprep.mubr.f32.mxu0 0.0
    %1260 = vmatmul.mubr.f32.gmra.mrb[0].mxu0 %v1007
    %v1261 = vpop.f32.mrb[0].mxu0
    %v1262 = vadd.f32 0.0, %v1261
    %v1263 = vpop.f32.mrb[0].mxu0
    %1264 = vdwg.mxu0
    %v1265 = vld [vmem:[#allocation11] sm:$0xff]
    %v1266 = vld [vmem:[#allocation11 + $0x8] sm:$0xff]
    %v1267 = vld [vmem:[#allocation11 + $0x10] sm:$0xff]
    %v1268 = vld [vmem:[#allocation11 + $0x18] sm:$0xff]
    %v1269 = vld [vmem:[#allocation11 + $0x20] sm:$0xff]
    %v1270 = vld [vmem:[#allocation11 + $0x28] sm:$0xff]
    %v1271 = vld [vmem:[#allocation11 + $0x30] sm:$0xff]
    %v1272 = vld [vmem:[#allocation11 + $0x38] sm:$0xff]
    %v1273 = vld [vmem:[#allocation11 + $0x40] sm:$0xff]
    %v1274 = vld [vmem:[#allocation11 + $0x48] sm:$0xff]
    %v1275 = vld [vmem:[#allocation11 + $0x50] sm:$0xff]
    %v1276 = vld [vmem:[#allocation11 + $0x58] sm:$0xff]
    %v1277 = vld [vmem:[#allocation11 + $0x60] sm:$0xff]
    %v1278 = vld [vmem:[#allocation11 + $0x68] sm:$0xff]
    %v1279 = vld [vmem:[#allocation11 + $0x70] sm:$0xff]
    %v1280 = vld [vmem:[#allocation11 + $0x78] sm:$0xff]
    %v1281 = vld [vmem:[%s8] sm:$0x1]
    %v1283 = vlaneseq
    %v1284 = vshrl.u32 %v1283, 7
    %v1285 = vsub.s32 0, %v1284
    %v1286 = vrot.slane %v1281, %v1285
    %v1304 = vsel %vm698, %v1019, %v1013
    %v1305 = vsel %vm700, %v1025, %v1304
    %v1306 = vsel %vm702, %v1031, %v1305
    %v1307 = vsel %vm704, %v1037, %v1306
    %v1308 = vsel %vm706, %v1043, %v1307
    %v1309 = vsel %vm708, %v1049, %v1308
    %v1310 = vsel %vm710, %v1055, %v1309
    %v1311 = vsel %vm698, %v1067, %v1061
    %v1312 = vsel %vm700, %v1073, %v1311
    %v1313 = vsel %vm702, %v1079, %v1312
    %v1314 = vsel %vm704, %v1085, %v1313
    %v1315 = vsel %vm706, %v1091, %v1314
    %v1316 = vsel %vm708, %v1097, %v1315
    %v1317 = vsel %vm710, %v1103, %v1316
    %1320 = vmatprep.subr.mxu0 0.0
    %1321 = vmatpush1.msra.mxu0 %v1265
    %1322 = vmatprep.subr.mxu0 0.0
    %1323 = vmatpush1.msra.mxu0 %v1266
    %1324 = vmatprep.subr.mxu0 0.0
    %1325 = vmatpush1.msra.mxu0 %v1267
    %1326 = vmatprep.subr.mxu0 0.0
    %1327 = vmatpush1.msra.mxu0 %v1268
    %1328 = vmatprep.subr.mxu0 0.0
    %1329 = vmatpush1.msra.mxu0 %v1269
    %1330 = vmatprep.subr.mxu0 0.0
    %1331 = vmatpush1.msra.mxu0 %v1270
    %1332 = vmatprep.subr.mxu0 0.0
    %1333 = vmatpush1.msra.mxu0 %v1271
    %1334 = vmatprep.subr.mxu0 0.0
    %1335 = vmatpush1.msra.mxu0 %v1272
    %1336 = vmatprep.subr.mxu0 0.0
    %1337 = vmatpush1.msra.mxu0 %v1273
    %1338 = vmatprep.subr.mxu0 0.0
    %1339 = vmatpush1.msra.mxu0 %v1274
    %1340 = vmatprep.subr.mxu0 0.0
    %1341 = vmatpush1.msra.mxu0 %v1275
    %1342 = vmatprep.subr.mxu0 0.0
    %1343 = vmatpush1.msra.mxu0 %v1276
    %1344 = vmatprep.subr.mxu0 0.0
    %1345 = vmatpush1.msra.mxu0 %v1277
    %1346 = vmatprep.subr.mxu0 0.0
    %1347 = vmatpush1.msra.mxu0 %v1278
    %1348 = vmatprep.subr.mxu0 0.0
    %1349 = vmatpush1.msra.mxu0 %v1279
    %1350 = vmatprep.subr.mxu0 0.0
    %1351 = vmatpush1.msra.mxu0 %v1280
    %1352 = vmatprep.subr.mxu0 0.0
    %1353 = vmatpush1.msra.mxu0 0.0
    %1354 = vmatprep.subr.mxu0 0.0
    %1355 = vmatpush1.msra.mxu0 0.0
    %1356 = vmatprep.subr.mxu0 0.0
    %1357 = vmatpush1.msra.mxu0 0.0
    %1358 = vmatprep.subr.mxu0 0.0
    %1359 = vmatpush1.msra.mxu0 0.0
    %1360 = vmatprep.subr.mxu0 0.0
    %1361 = vmatpush1.msra.mxu0 0.0
    %1362 = vmatprep.subr.mxu0 0.0
    %1363 = vmatpush1.msra.mxu0 0.0
    %1364 = vmatprep.subr.mxu0 0.0
    %1365 = vmatpush1.msra.mxu0 0.0
    %1366 = vmatprep.subr.mxu0 0.0
    %1367 = vmatpush1.msra.mxu0 0.0
    %1368 = vmatprep.subr.mxu0 0.0
    %1369 = vmatpush1.msra.mxu0 0.0
    %1370 = vmatprep.subr.mxu0 0.0
    %1371 = vmatpush1.msra.mxu0 0.0
    %1372 = vmatprep.subr.mxu0 0.0
    %1373 = vmatpush1.msra.mxu0 0.0
    %1374 = vmatprep.subr.mxu0 0.0
    %1375 = vmatpush1.msra.mxu0 0.0
    %1376 = vmatprep.subr.mxu0 0.0
    %1377 = vmatpush1.msra.mxu0 0.0
    %1378 = vmatprep.subr.mxu0 0.0
    %1379 = vmatpush1.msra.mxu0 0.0
    %1380 = vmatprep.subr.mxu0 0.0
    %1381 = vmatpush1.msra.mxu0 0.0
    %1382 = vmatprep.subr.mxu0 0.0
    %1383 = vmatpush1.msra.mxu0 0.0
    %1384 = vmatprep.mubr.f32.mxu0 0.0
    %1385 = vmatmul.mubr.f32.gmra.mrb[0].mxu0 %v1310
    %v1386 = vpop.f32.mrb[0].mxu0
    %v1387 = vadd.f32 %v1286, %v1386
    %v1388 = vpop.f32.mrb[0].mxu0
    %1389 = vmatprep.mubr.f32.mxu0 0.0
    %1390 = vmatmul.mubr.f32.gmra.mrb[0].mxu0 %v1317
    %v1391 = vpop.f32.mrb[0].mxu0
    %v1392 = vadd.f32 %v1286, %v1391
    %v1393 = vpop.f32.mrb[0].mxu0
    %1394 = vdwg.mxu0
    %v1397 = vcombine.high %v1387, %v1387
    %v1399 = vunpack.c.l.s4 1966171168
    %v1400 = vunpack.c.0.s8 %v1399
    %v1401 = vlaneseq
    %v1402 = vshrl.u32 %v1401, 7
    %v1403 = vsub.s32 %v1400, %v1402
    %v1404 = vrot.slane %v1387, %v1403
    %v1406 = vunpack.c.l.s4 1966171168
    %v1407 = vunpack.c.0.s8 %v1406
    %v1408 = vlaneseq
    %v1409 = vshrl.u32 %v1408, 7
    %v1410 = vsub.s32 %v1407, %v1409
    %v1411 = vrot.slane %v1397, %v1410
    %v1412 = vcombine.high %v1404, %v1404
    %v1413 = vcombine.high %v1411, %v1411
    %v1415 = vunpack.c.l.s4 1966171168
    %v1416 = vunpack.c.0.s8 %v1415
    %v1417 = vlaneseq
    %v1418 = vshrl.u32 %v1417, 7
    %v1419 = vsub.s32 %v1416, %v1418
    %v1420 = vrot.slane %v1404, %v1419
    %v1422 = vunpack.c.l.s4 1966171168
    %v1423 = vunpack.c.0.s8 %v1422
    %v1424 = vlaneseq
    %v1425 = vshrl.u32 %v1424, 7
    %v1426 = vsub.s32 %v1423, %v1425
    %v1427 = vrot.slane %v1411, %v1426
    %v1429 = vunpack.c.l.s4 1966171168
    %v1430 = vunpack.c.0.s8 %v1429
    %v1431 = vlaneseq
    %v1432 = vshrl.u32 %v1431, 7
    %v1433 = vsub.s32 %v1430, %v1432
    %v1434 = vrot.slane %v1412, %v1433
    %v1436 = vunpack.c.l.s4 1966171168
    %v1437 = vunpack.c.0.s8 %v1436
    %v1438 = vlaneseq
    %v1439 = vshrl.u32 %v1438, 7
    %v1440 = vsub.s32 %v1437, %v1439
    %v1441 = vrot.slane %v1413, %v1440
    %v1442 = vcombine.high %v1420, %v1420
    %v1443 = vcombine.high %v1427, %v1427
    %v1444 = vcombine.high %v1434, %v1434
    %v1445 = vcombine.high %v1441, %v1441
    %v1446 = vcombine.high %v1392, %v1392
    %v1448 = vunpack.c.l.s4 1966171168
    %v1449 = vunpack.c.0.s8 %v1448
    %v1450 = vlaneseq
    %v1451 = vshrl.u32 %v1450, 7
    %v1452 = vsub.s32 %v1449, %v1451
    %v1453 = vrot.slane %v1392, %v1452
    %v1455 = vunpack.c.l.s4 1966171168
    %v1456 = vunpack.c.0.s8 %v1455
    %v1457 = vlaneseq
    %v1458 = vshrl.u32 %v1457, 7
    %v1459 = vsub.s32 %v1456, %v1458
    %v1460 = vrot.slane %v1446, %v1459
    %v1461 = vcombine.high %v1453, %v1453
    %v1462 = vcombine.high %v1460, %v1460
    %v1464 = vunpack.c.l.s4 1966171168
    %v1465 = vunpack.c.0.s8 %v1464
    %v1466 = vlaneseq
    %v1467 = vshrl.u32 %v1466, 7
    %v1468 = vsub.s32 %v1465, %v1467
    %v1469 = vrot.slane %v1453, %v1468
    %v1471 = vunpack.c.l.s4 1966171168
    %v1472 = vunpack.c.0.s8 %v1471
    %v1473 = vlaneseq
    %v1474 = vshrl.u32 %v1473, 7
    %v1475 = vsub.s32 %v1472, %v1474
    %v1476 = vrot.slane %v1460, %v1475
    %v1478 = vunpack.c.l.s4 1966171168
    %v1479 = vunpack.c.0.s8 %v1478
    %v1480 = vlaneseq
    %v1481 = vshrl.u32 %v1480, 7
    %v1482 = vsub.s32 %v1479, %v1481
    %v1483 = vrot.slane %v1461, %v1482
    %v1485 = vunpack.c.l.s4 1966171168
    %v1486 = vunpack.c.0.s8 %v1485
    %v1487 = vlaneseq
    %v1488 = vshrl.u32 %v1487, 7
    %v1489 = vsub.s32 %v1486, %v1488
    %v1490 = vrot.slane %v1462, %v1489
    %v1491 = vcombine.high %v1469, %v1469
    %v1492 = vcombine.high %v1476, %v1476
    %v1493 = vcombine.high %v1483, %v1483
    %v1494 = vcombine.high %v1490, %v1490
    %v1495 = vlaneseq
    %v1496 = vshrl.u32 %v1495, 7
    %v1497 = vsub.s32 0, %v1496
    %v1498 = vrot.slane %v1420, %v1497
    %v1499 = vlaneseq
    %v1500 = vshrl.u32 %v1499, 7
    %v1501 = vsub.s32 0, %v1500
    %v1502 = vrot.slane %v1434, %v1501
    %v1503 = vlaneseq
    %v1504 = vshrl.u32 %v1503, 7
    %v1505 = vsub.s32 0, %v1504
    %v1506 = vrot.slane %v1442, %v1505
    %v1507 = vlaneseq
    %v1508 = vshrl.u32 %v1507, 7
    %v1509 = vsub.s32 0, %v1508
    %v1510 = vrot.slane %v1444, %v1509
    %v1511 = vlaneseq
    %v1512 = vshrl.u32 %v1511, 7
    %v1513 = vsub.s32 0, %v1512
    %v1514 = vrot.slane %v1427, %v1513
    %v1515 = vlaneseq
    %v1516 = vshrl.u32 %v1515, 7
    %v1517 = vsub.s32 0, %v1516
    %v1518 = vrot.slane %v1441, %v1517
    %v1519 = vlaneseq
    %v1520 = vshrl.u32 %v1519, 7
    %v1521 = vsub.s32 0, %v1520
    %v1522 = vrot.slane %v1443, %v1521
    %v1523 = vlaneseq
    %v1524 = vshrl.u32 %v1523, 7
    %v1525 = vsub.s32 0, %v1524
    %v1526 = vrot.slane %v1445, %v1525
    %v1527 = vlaneseq
    %v1528 = vshrl.u32 %v1527, 7
    %v1529 = vsub.s32 0, %v1528
    %v1530 = vrot.slane %v1469, %v1529
    %v1531 = vlaneseq
    %v1532 = vshrl.u32 %v1531, 7
    %v1533 = vsub.s32 0, %v1532
    %v1534 = vrot.slane %v1483, %v1533
    %v1535 = vlaneseq
    %v1536 = vshrl.u32 %v1535, 7
    %v1537 = vsub.s32 0, %v1536
    %v1538 = vrot.slane %v1491, %v1537
    %v1539 = vlaneseq
    %v1540 = vshrl.u32 %v1539, 7
    %v1541 = vsub.s32 0, %v1540
    %v1542 = vrot.slane %v1493, %v1541
    %v1543 = vlaneseq
    %v1544 = vshrl.u32 %v1543, 7
    %v1545 = vsub.s32 0, %v1544
    %v1546 = vrot.slane %v1476, %v1545
    %v1547 = vlaneseq
    %v1548 = vshrl.u32 %v1547, 7
    %v1549 = vsub.s32 0, %v1548
    %v1550 = vrot.slane %v1490, %v1549
    %v1551 = vlaneseq
    %v1552 = vshrl.u32 %v1551, 7
    %v1553 = vsub.s32 0, %v1552
    %v1554 = vrot.slane %v1492, %v1553
    %v1555 = vlaneseq
    %v1556 = vshrl.u32 %v1555, 7
    %v1557 = vsub.s32 0, %v1556
    %v1558 = vrot.slane %v1494, %v1557
    %v1575 = vadd.f32 %v1187, %v1498
    %v1576 = vadd.f32 %v1192, %v1502
    %v1577 = vadd.f32 %v1197, %v1506
    %v1578 = vadd.f32 %v1202, %v1510
    %v1579 = vadd.f32 %v1207, %v1514
    %v1580 = vadd.f32 %v1212, %v1518
    %v1581 = vadd.f32 %v1217, %v1522
    %v1582 = vadd.f32 %v1222, %v1526
    %v1583 = vadd.f32 %v1227, %v1530
    %v1584 = vadd.f32 %v1232, %v1534
    %v1585 = vadd.f32 %v1237, %v1538
    %v1586 = vadd.f32 %v1242, %v1542
    %v1587 = vadd.f32 %v1247, %v1546
    %v1588 = vadd.f32 %v1252, %v1550
    %v1589 = vadd.f32 %v1257, %v1554
    %v1590 = vadd.f32 %v1262, %v1558
    %v1591 = vmax.f32 %v1575, 0.0
    %v1592 = vmax.f32 %v1576, 0.0
    %v1593 = vmax.f32 %v1577, 0.0
    %v1594 = vmax.f32 %v1578, 0.0
    %v1595 = vmax.f32 %v1579, 0.0
    %v1596 = vmax.f32 %v1580, 0.0
    %v1597 = vmax.f32 %v1581, 0.0
    %v1598 = vmax.f32 %v1582, 0.0
    %v1599 = vmax.f32 %v1583, 0.0
    %v1600 = vmax.f32 %v1584, 0.0
    %v1601 = vmax.f32 %v1585, 0.0
    %v1602 = vmax.f32 %v1586, 0.0
    %v1603 = vmax.f32 %v1587, 0.0
    %v1604 = vmax.f32 %v1588, 0.0
    %v1605 = vmax.f32 %v1589, 0.0
    %v1606 = vmax.f32 %v1590, 0.0
    %v1607 = vrot.slane %v1591, 4
    %v1608 = vmax.f32 %v1591, %v1607
    %v1609 = vrot.slane %v1608, 2
    %v1610 = vmax.f32 %v1608, %v1609
    %v1611 = vrot.slane %v1610, 1
    %v1612 = vmax.f32 %v1610, %v1611
    %v1613 = vrot.slane %v1592, 4
    %v1614 = vmax.f32 %v1592, %v1613
    %v1615 = vrot.slane %v1614, 2
    %v1616 = vmax.f32 %v1614, %v1615
    %v1617 = vrot.slane %v1616, 1
    %v1618 = vmax.f32 %v1616, %v1617
    %v1619 = vrot.slane %v1593, 4
    %v1620 = vmax.f32 %v1593, %v1619
    %v1621 = vrot.slane %v1620, 2
    %v1622 = vmax.f32 %v1620, %v1621
    %v1623 = vrot.slane %v1622, 1
    %v1624 = vmax.f32 %v1622, %v1623
    %v1625 = vrot.slane %v1594, 4
    %v1626 = vmax.f32 %v1594, %v1625
    %v1627 = vrot.slane %v1626, 2
    %v1628 = vmax.f32 %v1626, %v1627
    %v1629 = vrot.slane %v1628, 1
    %v1630 = vmax.f32 %v1628, %v1629
    %v1631 = vrot.slane %v1595, 4
    %v1632 = vmax.f32 %v1595, %v1631
    %v1633 = vrot.slane %v1632, 2
    %v1634 = vmax.f32 %v1632, %v1633
    %v1635 = vrot.slane %v1634, 1
    %v1636 = vmax.f32 %v1634, %v1635
    %v1637 = vrot.slane %v1596, 4
    %v1638 = vmax.f32 %v1596, %v1637
    %v1639 = vrot.slane %v1638, 2
    %v1640 = vmax.f32 %v1638, %v1639
    %v1641 = vrot.slane %v1640, 1
    %v1642 = vmax.f32 %v1640, %v1641
    %v1643 = vrot.slane %v1597, 4
    %v1644 = vmax.f32 %v1597, %v1643
    %v1645 = vrot.slane %v1644, 2
    %v1646 = vmax.f32 %v1644, %v1645
    %v1647 = vrot.slane %v1646, 1
    %v1648 = vmax.f32 %v1646, %v1647
    %v1649 = vrot.slane %v1598, 4
    %v1650 = vmax.f32 %v1598, %v1649
    %v1651 = vrot.slane %v1650, 2
    %v1652 = vmax.f32 %v1650, %v1651
    %v1653 = vrot.slane %v1652, 1
    %v1654 = vmax.f32 %v1652, %v1653
    %v1655 = vrot.slane %v1599, 4
    %v1656 = vmax.f32 %v1599, %v1655
    %v1657 = vrot.slane %v1656, 2
    %v1658 = vmax.f32 %v1656, %v1657
    %v1659 = vrot.slane %v1658, 1
    %v1660 = vmax.f32 %v1658, %v1659
    %v1661 = vrot.slane %v1600, 4
    %v1662 = vmax.f32 %v1600, %v1661
    %v1663 = vrot.slane %v1662, 2
    %v1664 = vmax.f32 %v1662, %v1663
    %v1665 = vrot.slane %v1664, 1
    %v1666 = vmax.f32 %v1664, %v1665
    %v1667 = vrot.slane %v1601, 4
    %v1668 = vmax.f32 %v1601, %v1667
    %v1669 = vrot.slane %v1668, 2
    %v1670 = vmax.f32 %v1668, %v1669
    %v1671 = vrot.slane %v1670, 1
    %v1672 = vmax.f32 %v1670, %v1671
    %v1673 = vrot.slane %v1602, 4
    %v1674 = vmax.f32 %v1602, %v1673
    %v1675 = vrot.slane %v1674, 2
    %v1676 = vmax.f32 %v1674, %v1675
    %v1677 = vrot.slane %v1676, 1
    %v1678 = vmax.f32 %v1676, %v1677
    %v1679 = vrot.slane %v1603, 4
    %v1680 = vmax.f32 %v1603, %v1679
    %v1681 = vrot.slane %v1680, 2
    %v1682 = vmax.f32 %v1680, %v1681
    %v1683 = vrot.slane %v1682, 1
    %v1684 = vmax.f32 %v1682, %v1683
    %v1685 = vrot.slane %v1604, 4
    %v1686 = vmax.f32 %v1604, %v1685
    %v1687 = vrot.slane %v1686, 2
    %v1688 = vmax.f32 %v1686, %v1687
    %v1689 = vrot.slane %v1688, 1
    %v1690 = vmax.f32 %v1688, %v1689
    %v1691 = vrot.slane %v1605, 4
    %v1692 = vmax.f32 %v1605, %v1691
    %v1693 = vrot.slane %v1692, 2
    %v1694 = vmax.f32 %v1692, %v1693
    %v1695 = vrot.slane %v1694, 1
    %v1696 = vmax.f32 %v1694, %v1695
    %v1697 = vrot.slane %v1606, 4
    %v1698 = vmax.f32 %v1606, %v1697
    %v1699 = vrot.slane %v1698, 2
    %v1700 = vmax.f32 %v1698, %v1699
    %v1701 = vrot.slane %v1700, 1
    %v1702 = vmax.f32 %v1700, %v1701
    %v1703 = vld [vmem:[#allocation13] sm:$0xff]
    %v1704 = vld [vmem:[#allocation13 + $0x8] sm:$0xff]
    %v1705 = vld [vmem:[#allocation13 + $0x10] sm:$0xff]
    %v1706 = vld [vmem:[#allocation13 + $0x18] sm:$0xff]
    %v1707 = vld [vmem:[#allocation13 + $0x20] sm:$0xff]
    %v1708 = vld [vmem:[#allocation13 + $0x28] sm:$0xff]
    %v1709 = vld [vmem:[#allocation13 + $0x30] sm:$0xff]
    %v1710 = vld [vmem:[#allocation13 + $0x38] sm:$0xff]
    %v1711 = vld [vmem:[#allocation13 + $0x40] sm:$0xff]
    %v1712 = vld [vmem:[#allocation13 + $0x48] sm:$0xff]
    %v1713 = vld [vmem:[#allocation13 + $0x50] sm:$0xff]
    %v1714 = vld [vmem:[#allocation13 + $0x58] sm:$0xff]
    %v1715 = vld [vmem:[#allocation13 + $0x60] sm:$0xff]
    %v1716 = vld [vmem:[#allocation13 + $0x68] sm:$0xff]
    %v1717 = vld [vmem:[#allocation13 + $0x70] sm:$0xff]
    %v1718 = vld [vmem:[#allocation13 + $0x78] sm:$0xff]
    %v1719 = vld [vmem:[#allocation13 + $0x80] sm:$0xff]
    %v1720 = vld [vmem:[#allocation13 + $0x88] sm:$0xff]
    %v1721 = vld [vmem:[#allocation13 + $0x90] sm:$0xff]
    %v1722 = vld [vmem:[#allocation13 + $0x98] sm:$0xff]
    %v1723 = vld [vmem:[#allocation13 + $0xa0] sm:$0xff]
    %v1724 = vld [vmem:[#allocation13 + $0xa8] sm:$0xff]
    %v1725 = vld [vmem:[#allocation13 + $0xb0] sm:$0xff]
    %v1726 = vld [vmem:[#allocation13 + $0xb8] sm:$0xff]
    %v1727 = vld [vmem:[#allocation13 + $0xc0] sm:$0xff]
    %v1728 = vld [vmem:[#allocation13 + $0xc8] sm:$0xff]
    %v1729 = vld [vmem:[#allocation13 + $0xd0] sm:$0xff]
    %v1730 = vld [vmem:[#allocation13 + $0xd8] sm:$0xff]
    %v1731 = vld [vmem:[#allocation13 + $0xe0] sm:$0xff]
    %v1732 = vld [vmem:[#allocation13 + $0xe8] sm:$0xff]
    %v1733 = vld [vmem:[#allocation13 + $0xf0] sm:$0xff]
    %v1734 = vld [vmem:[#allocation13 + $0xf8] sm:$0xff]
    %v1735 = vld [vmem:[#allocation13 + $0x100] sm:$0xff]
    %v1736 = vld [vmem:[#allocation13 + $0x108] sm:$0xff]
    %v1737 = vld [vmem:[#allocation13 + $0x110] sm:$0xff]
    %v1738 = vld [vmem:[#allocation13 + $0x118] sm:$0xff]
    %v1739 = vld [vmem:[#allocation13 + $0x120] sm:$0xff]
    %v1740 = vld [vmem:[#allocation13 + $0x128] sm:$0xff]
    %v1741 = vld [vmem:[#allocation13 + $0x130] sm:$0xff]
    %v1742 = vld [vmem:[#allocation13 + $0x138] sm:$0xff]
    %v1743 = vld [vmem:[#allocation13 + $0x140] sm:$0xff]
    %v1744 = vld [vmem:[#allocation13 + $0x148] sm:$0xff]
    %v1745 = vld [vmem:[#allocation13 + $0x150] sm:$0xff]
    %v1746 = vld [vmem:[#allocation13 + $0x158] sm:$0xff]
    %v1747 = vld [vmem:[#allocation13 + $0x160] sm:$0xff]
    %v1748 = vld [vmem:[#allocation13 + $0x168] sm:$0xff]
    %v1749 = vld [vmem:[#allocation13 + $0x170] sm:$0xff]
    %v1750 = vld [vmem:[#allocation13 + $0x178] sm:$0xff]
    %v1767 = vsel %vm698, %v1618, %v1612
    %v1768 = vsel %vm700, %v1624, %v1767
    %v1769 = vsel %vm702, %v1630, %v1768
    %v1770 = vsel %vm704, %v1636, %v1769
    %v1771 = vsel %vm706, %v1642, %v1770
    %v1772 = vsel %vm708, %v1648, %v1771
    %v1773 = vsel %vm710, %v1654, %v1772
    %v1774 = vsel %vm698, %v1666, %v1660
    %v1775 = vsel %vm700, %v1672, %v1774
    %v1776 = vsel %vm702, %v1678, %v1775
    %v1777 = vsel %vm704, %v1684, %v1776
    %v1778 = vsel %vm706, %v1690, %v1777
    %v1779 = vsel %vm708, %v1696, %v1778
    %v1780 = vsel %vm710, %v1702, %v1779
    %1783 = vmatprep.subr.mxu0 %v1704
    %1784 = vmatpush1.msra.mxu0 %v1703
    %1785 = vmatprep.subr.mxu0 %v1707
    %1786 = vmatpush1.msra.mxu0 %v1706
    %1787 = vmatprep.subr.mxu0 %v1710
    %1788 = vmatpush1.msra.mxu0 %v1709
    %1789 = vmatprep.subr.mxu0 %v1713
    %1790 = vmatpush1.msra.mxu0 %v1712
    %1791 = vmatprep.subr.mxu0 %v1716
    %1792 = vmatpush1.msra.mxu0 %v1715
    %1793 = vmatprep.subr.mxu0 %v1719
    %1794 = vmatpush1.msra.mxu0 %v1718
    %1795 = vmatprep.subr.mxu0 %v1722
    %1796 = vmatpush1.msra.mxu0 %v1721
    %1797 = vmatprep.subr.mxu0 %v1725
    %1798 = vmatpush1.msra.mxu0 %v1724
    %1799 = vmatprep.subr.mxu0 %v1728
    %1800 = vmatpush1.msra.mxu0 %v1727
    %1801 = vmatprep.subr.mxu0 %v1731
    %1802 = vmatpush1.msra.mxu0 %v1730
    %1803 = vmatprep.subr.mxu0 %v1734
    %1804 = vmatpush1.msra.mxu0 %v1733
    %1805 = vmatprep.subr.mxu0 %v1737
    %1806 = vmatpush1.msra.mxu0 %v1736
    %1807 = vmatprep.subr.mxu0 %v1740
    %1808 = vmatpush1.msra.mxu0 %v1739
    %1809 = vmatprep.subr.mxu0 %v1743
    %1810 = vmatpush1.msra.mxu0 %v1742
    %1811 = vmatprep.subr.mxu0 %v1746
    %1812 = vmatpush1.msra.mxu0 %v1745
    %1813 = vmatprep.subr.mxu0 %v1749
    %1814 = vmatpush1.msra.mxu0 %v1748
    %1815 = vmatprep.subr.mxu0 0.0
    %1816 = vmatpush1.msra.mxu0 0.0
    %1817 = vmatprep.subr.mxu0 0.0
    %1818 = vmatpush1.msra.mxu0 0.0
    %1819 = vmatprep.subr.mxu0 0.0
    %1820 = vmatpush1.msra.mxu0 0.0
    %1821 = vmatprep.subr.mxu0 0.0
    %1822 = vmatpush1.msra.mxu0 0.0
    %1823 = vmatprep.subr.mxu0 0.0
    %1824 = vmatpush1.msra.mxu0 0.0
    %1825 = vmatprep.subr.mxu0 0.0
    %1826 = vmatpush1.msra.mxu0 0.0
    %1827 = vmatprep.subr.mxu0 0.0
    %1828 = vmatpush1.msra.mxu0 0.0
    %1829 = vmatprep.subr.mxu0 0.0
    %1830 = vmatpush1.msra.mxu0 0.0
    %1831 = vmatprep.subr.mxu0 0.0
    %1832 = vmatpush1.msra.mxu0 0.0
    %1833 = vmatprep.subr.mxu0 0.0
    %1834 = vmatpush1.msra.mxu0 0.0
    %1835 = vmatprep.subr.mxu0 0.0
    %1836 = vmatpush1.msra.mxu0 0.0
    %1837 = vmatprep.subr.mxu0 0.0
    %1838 = vmatpush1.msra.mxu0 0.0
    %1839 = vmatprep.subr.mxu0 0.0
    %1840 = vmatpush1.msra.mxu0 0.0
    %1841 = vmatprep.subr.mxu0 0.0
    %1842 = vmatpush1.msra.mxu0 0.0
    %1843 = vmatprep.subr.mxu0 0.0
    %1844 = vmatpush1.msra.mxu0 0.0
    %1845 = vmatprep.subr.mxu0 0.0
    %1846 = vmatpush1.msra.mxu0 0.0
    %1847 = vmatprep.mubr.f32.mxu0 0.0
    %1848 = vmatmul.mubr.f32.gmra.mrb[0].mxu0 %v1773
    %v1849 = vpop.f32.mrb[0].mxu0
    %v1850 = vadd.f32 0.0, %v1849
    %v1851 = vpop.f32.mrb[0].mxu0
    %v1852 = vadd.f32 0.0, %v1851
    %1853 = vmatprep.mubr.f32.mxu0 0.0
    %1854 = vmatmul.mubr.f32.gmra.mrb[0].mxu0 %v1780
    %v1855 = vpop.f32.mrb[0].mxu0
    %v1856 = vadd.f32 0.0, %v1855
    %v1857 = vpop.f32.mrb[0].mxu0
    %v1858 = vadd.f32 0.0, %v1857
    %1859 = vdwg.mxu0
    %1860 = vmatprep.subr.mxu0 0.0
    %1861 = vmatpush1.msra.mxu0 %v1705
    %1862 = vmatprep.subr.mxu0 0.0
    %1863 = vmatpush1.msra.mxu0 %v1708
    %1864 = vmatprep.subr.mxu0 0.0
    %1865 = vmatpush1.msra.mxu0 %v1711
    %1866 = vmatprep.subr.mxu0 0.0
    %1867 = vmatpush1.msra.mxu0 %v1714
    %1868 = vmatprep.subr.mxu0 0.0
    %1869 = vmatpush1.msra.mxu0 %v1717
    %1870 = vmatprep.subr.mxu0 0.0
    %1871 = vmatpush1.msra.mxu0 %v1720
    %1872 = vmatprep.subr.mxu0 0.0
    %1873 = vmatpush1.msra.mxu0 %v1723
    %1874 = vmatprep.subr.mxu0 0.0
    %1875 = vmatpush1.msra.mxu0 %v1726
    %1876 = vmatprep.subr.mxu0 0.0
    %1877 = vmatpush1.msra.mxu0 %v1729
    %1878 = vmatprep.subr.mxu0 0.0
    %1879 = vmatpush1.msra.mxu0 %v1732
    %1880 = vmatprep.subr.mxu0 0.0
    %1881 = vmatpush1.msra.mxu0 %v1735
    %1882 = vmatprep.subr.mxu0 0.0
    %1883 = vmatpush1.msra.mxu0 %v1738
    %1884 = vmatprep.subr.mxu0 0.0
    %1885 = vmatpush1.msra.mxu0 %v1741
    %1886 = vmatprep.subr.mxu0 0.0
    %1887 = vmatpush1.msra.mxu0 %v1744
    %1888 = vmatprep.subr.mxu0 0.0
    %1889 = vmatpush1.msra.mxu0 %v1747
    %1890 = vmatprep.subr.mxu0 0.0
    %1891 = vmatpush1.msra.mxu0 %v1750
    %1892 = vmatprep.subr.mxu0 0.0
    %1893 = vmatpush1.msra.mxu0 0.0
    %1894 = vmatprep.subr.mxu0 0.0
    %1895 = vmatpush1.msra.mxu0 0.0
    %1896 = vmatprep.subr.mxu0 0.0
    %1897 = vmatpush1.msra.mxu0 0.0
    %1898 = vmatprep.subr.mxu0 0.0
    %1899 = vmatpush1.msra.mxu0 0.0
    %1900 = vmatprep.subr.mxu0 0.0
    %1901 = vmatpush1.msra.mxu0 0.0
    %1902 = vmatprep.subr.mxu0 0.0
    %1903 = vmatpush1.msra.mxu0 0.0
    %1904 = vmatprep.subr.mxu0 0.0
    %1905 = vmatpush1.msra.mxu0 0.0
    %1906 = vmatprep.subr.mxu0 0.0
    %1907 = vmatpush1.msra.mxu0 0.0
    %1908 = vmatprep.subr.mxu0 0.0
    %1909 = vmatpush1.msra.mxu0 0.0
    %1910 = vmatprep.subr.mxu0 0.0
    %1911 = vmatpush1.msra.mxu0 0.0
    %1912 = vmatprep.subr.mxu0 0.0
    %1913 = vmatpush1.msra.mxu0 0.0
    %1914 = vmatprep.subr.mxu0 0.0
    %1915 = vmatpush1.msra.mxu0 0.0
    %1916 = vmatprep.subr.mxu0 0.0
    %1917 = vmatpush1.msra.mxu0 0.0
    %1918 = vmatprep.subr.mxu0 0.0
    %1919 = vmatpush1.msra.mxu0 0.0
    %1920 = vmatprep.subr.mxu0 0.0
    %1921 = vmatpush1.msra.mxu0 0.0
    %1922 = vmatprep.subr.mxu0 0.0
    %1923 = vmatpush1.msra.mxu0 0.0
    %1924 = vmatprep.mubr.f32.mxu0 0.0
    %1925 = vmatmul.mubr.f32.gmra.mrb[0].mxu0 %v1773
    %v1926 = vpop.f32.mrb[0].mxu0
    %v1927 = vadd.f32 0.0, %v1926
    %v1928 = vpop.f32.mrb[0].mxu0
    %1929 = vmatprep.mubr.f32.mxu0 0.0
    %1930 = vmatmul.mubr.f32.gmra.mrb[0].mxu0 %v1780
    %v1931 = vpop.f32.mrb[0].mxu0
    %v1932 = vadd.f32 0.0, %v1931
    %v1933 = vpop.f32.mrb[0].mxu0
    %1934 = vdwg.mxu0
    %1935 = vmatprep.subr.mxu0 0.0
    %1936 = vmatpush1.xpose.msra.mxu0 %v1852
    %1937 = vmatprep.subr.mxu0 0.0
    %1938 = vmatpush1.xpose.msra.mxu0 0.0
    %1939 = vmatprep.subr.mxu0 0.0
    %1940 = vmatpush1.xpose.msra.mxu0 0.0
    %1941 = vmatprep.subr.mxu0 0.0
    %1942 = vmatpush1.xpose.msra.mxu0 0.0
    %1943 = vmatprep.subr.mxu0 0.0
    %1944 = vmatpush1.xpose.msra.mxu0 0.0
    %1945 = vmatprep.subr.mxu0 0.0
    %1946 = vmatpush1.xpose.msra.mxu0 0.0
    %1947 = vmatprep.subr.mxu0 0.0
    %1948 = vmatpush1.xpose.msra.mxu0 0.0
    %1949 = vmatprep.subr.mxu0 0.0
    %1950 = vmatpush1.xpose.msra.mxu0 0.0
    %1951 = vmatprep.subr.mxu0 0.0
    %1952 = vmatpush1.xpose.msra.mxu0 0.0
    %1953 = vmatprep.subr.mxu0 0.0
    %1954 = vmatpush1.xpose.msra.mxu0 0.0
    %1955 = vmatprep.subr.mxu0 0.0
    %1956 = vmatpush1.xpose.msra.mxu0 0.0
    %1957 = vmatprep.subr.mxu0 0.0
    %1958 = vmatpush1.xpose.msra.mxu0 0.0
    %1959 = vmatprep.subr.mxu0 0.0
    %1960 = vmatpush1.xpose.msra.mxu0 0.0
    %1961 = vmatprep.subr.mxu0 0.0
    %1962 = vmatpush1.xpose.msra.mxu0 0.0
    %1963 = vmatprep.subr.mxu0 0.0
    %1964 = vmatpush1.xpose.msra.mxu0 0.0
    %1965 = vmatprep.subr.mxu0 0.0
    %1966 = vmatpush1.xpose.msra.mxu0 0.0
    %1967 = vmatprep.subr.mxu0 0.0
    %1968 = vmatpush1.xpose.msra.mxu0 0.0
    %1969 = vmatprep.subr.mxu0 0.0
    %1970 = vmatpush1.xpose.msra.mxu0 0.0
    %1971 = vmatprep.subr.mxu0 0.0
    %1972 = vmatpush1.xpose.msra.mxu0 0.0
    %1973 = vmatprep.subr.mxu0 0.0
    %1974 = vmatpush1.xpose.msra.mxu0 0.0
    %1975 = vmatprep.subr.mxu0 0.0
    %1976 = vmatpush1.xpose.msra.mxu0 0.0
    %1977 = vmatprep.subr.mxu0 0.0
    %1978 = vmatpush1.xpose.msra.mxu0 0.0
    %1979 = vmatprep.subr.mxu0 0.0
    %1980 = vmatpush1.xpose.msra.mxu0 0.0
    %1981 = vmatprep.subr.mxu0 0.0
    %1982 = vmatpush1.xpose.msra.mxu0 0.0
    %1983 = vmatprep.subr.mxu0 0.0
    %1984 = vmatpush1.xpose.msra.mxu0 0.0
    %1985 = vmatprep.subr.mxu0 0.0
    %1986 = vmatpush1.xpose.msra.mxu0 0.0
    %1987 = vmatprep.subr.mxu0 0.0
    %1988 = vmatpush1.xpose.msra.mxu0 0.0
    %1989 = vmatprep.subr.mxu0 0.0
    %1990 = vmatpush1.xpose.msra.mxu0 0.0
    %1991 = vmatprep.subr.mxu0 0.0
    %1992 = vmatpush1.xpose.msra.mxu0 0.0
    %1993 = vmatprep.subr.mxu0 0.0
    %1994 = vmatpush1.xpose.msra.mxu0 0.0
    %1995 = vmatprep.subr.mxu0 0.0
    %1996 = vmatpush1.xpose.msra.mxu0 0.0
    %1997 = vmatprep.subr.mxu0 0.0
    %1998 = vmatpush1.xpose.msra.mxu0 0.0
    %1999 = vmatprep.mubr.f32.mxu0 0.0
    %2000 = vmatmul.mubr.f32.gmra.mrb[0].mxu0 %v1850
    %v2001 = vpop.f32.mrb[0].mxu0
    %v2002 = vadd.f32 0.0, %v2001
    %v2003 = vpop.f32.mrb[0].mxu0
    %2004 = vdwg.mxu0
    %2005 = vmatprep.subr.mxu0 0.0
    %2006 = vmatpush1.xpose.msra.mxu0 %v1858
    %2007 = vmatprep.subr.mxu0 0.0
    %2008 = vmatpush1.xpose.msra.mxu0 0.0
    %2009 = vmatprep.subr.mxu0 0.0
    %2010 = vmatpush1.xpose.msra.mxu0 0.0
    %2011 = vmatprep.subr.mxu0 0.0
    %2012 = vmatpush1.xpose.msra.mxu0 0.0
    %2013 = vmatprep.subr.mxu0 0.0
    %2014 = vmatpush1.xpose.msra.mxu0 0.0
    %2015 = vmatprep.subr.mxu0 0.0
    %2016 = vmatpush1.xpose.msra.mxu0 0.0
    %2017 = vmatprep.subr.mxu0 0.0
    %2018 = vmatpush1.xpose.msra.mxu0 0.0
    %2019 = vmatprep.subr.mxu0 0.0
    %2020 = vmatpush1.xpose.msra.mxu0 0.0
    %2021 = vmatprep.subr.mxu0 0.0
    %2022 = vmatpush1.xpose.msra.mxu0 0.0
    %2023 = vmatprep.subr.mxu0 0.0
    %2024 = vmatpush1.xpose.msra.mxu0 0.0
    %2025 = vmatprep.subr.mxu0 0.0
    %2026 = vmatpush1.xpose.msra.mxu0 0.0
    %2027 = vmatprep.subr.mxu0 0.0
    %2028 = vmatpush1.xpose.msra.mxu0 0.0
    %2029 = vmatprep.subr.mxu0 0.0
    %2030 = vmatpush1.xpose.msra.mxu0 0.0
    %2031 = vmatprep.subr.mxu0 0.0
    %2032 = vmatpush1.xpose.msra.mxu0 0.0
    %2033 = vmatprep.subr.mxu0 0.0
    %2034 = vmatpush1.xpose.msra.mxu0 0.0
    %2035 = vmatprep.subr.mxu0 0.0
    %2036 = vmatpush1.xpose.msra.mxu0 0.0
    %2037 = vmatprep.subr.mxu0 0.0
    %2038 = vmatpush1.xpose.msra.mxu0 0.0
    %2039 = vmatprep.subr.mxu0 0.0
    %2040 = vmatpush1.xpose.msra.mxu0 0.0
    %2041 = vmatprep.subr.mxu0 0.0
    %2042 = vmatpush1.xpose.msra.mxu0 0.0
    %2043 = vmatprep.subr.mxu0 0.0
    %2044 = vmatpush1.xpose.msra.mxu0 0.0
    %2045 = vmatprep.subr.mxu0 0.0
    %2046 = vmatpush1.xpose.msra.mxu0 0.0
    %2047 = vmatprep.subr.mxu0 0.0
    %2048 = vmatpush1.xpose.msra.mxu0 0.0
    %2049 = vmatprep.subr.mxu0 0.0
    %2050 = vmatpush1.xpose.msra.mxu0 0.0
    %2051 = vmatprep.subr.mxu0 0.0
    %2052 = vmatpush1.xpose.msra.mxu0 0.0
    %2053 = vmatprep.subr.mxu0 0.0
    %2054 = vmatpush1.xpose.msra.mxu0 0.0
    %2055 = vmatprep.subr.mxu0 0.0
    %2056 = vmatpush1.xpose.msra.mxu0 0.0
    %2057 = vmatprep.subr.mxu0 0.0
    %2058 = vmatpush1.xpose.msra.mxu0 0.0
    %2059 = vmatprep.subr.mxu0 0.0
    %2060 = vmatpush1.xpose.msra.mxu0 0.0
    %2061 = vmatprep.subr.mxu0 0.0
    %2062 = vmatpush1.xpose.msra.mxu0 0.0
    %2063 = vmatprep.subr.mxu0 0.0
    %2064 = vmatpush1.xpose.msra.mxu0 0.0
    %2065 = vmatprep.subr.mxu0 0.0
    %2066 = vmatpush1.xpose.msra.mxu0 0.0
    %2067 = vmatprep.subr.mxu0 0.0
    %2068 = vmatpush1.xpose.msra.mxu0 0.0
    %2069 = vmatprep.mubr.f32.mxu0 0.0
    %2070 = vmatmul.mubr.f32.gmra.mrb[0].mxu0 %v1856
    %v2071 = vpop.f32.mrb[0].mxu0
    %v2072 = vadd.f32 0.0, %v2071
    %v2073 = vpop.f32.mrb[0].mxu0
    %2074 = vdwg.mxu0
    %v2075 = vmul.f32 %v2002, 0.125
    %v2076 = vmul.f32 %v2072, 0.125
    %v2077 = vsel %vm192, %v2075, -inf
    %2078 = vmax.xlane.f32.xlu0 %v2077
    %v2079 = vpop.xlane.xlu0 %2078
    %v2080 = vsel %vm192, %v2076, -inf
    %2081 = vmax.xlane.f32.xlu0 %v2080
    %v2082 = vpop.xlane.xlu0 %2081
    %v2083 = vsub.f32 %v2075, %v2079
    %v2084 = vsub.f32 %v2076, %v2082
    %v2085 = vmul.f32 %v2083, 1.442695
    %v2086 = vpow.pop %v2085
    %v2087 = vmul.f32 %v2084, 1.442695
    %v2088 = vpow.pop %v2087
    %v2089 = vsel %vm192, %v2086, 0.0
    %2090 = vadd.xlane.f32.xlu0 %v2089
    %v2091 = vpop.xlane.xlu0 %2090
    %v2092 = vsel %vm192, %v2088, 0.0
    %2093 = vadd.xlane.f32.xlu0 %v2092
    %v2094 = vpop.xlane.xlu0 %2093
    %v2095 = vrcp.pop %v2091
    %v2096 = vrcp.pop %v2094
    %v2097 = vmul.f32 %v2086, %v2095
    %v2098 = vmul.f32 %v2088, %v2096
    %v2100 = vsel %vm192, %v2097, 0
    %2102 = vmatprep.subr.mxu0 0.0
    %2103 = vmatpush1.msra.mxu0 %v1927
    %2104 = vmatprep.subr.mxu0 0.0
    %2105 = vmatpush1.msra.mxu0 0.0
    %2106 = vmatprep.subr.mxu0 0.0
    %2107 = vmatpush1.msra.mxu0 0.0
    %2108 = vmatprep.subr.mxu0 0.0
    %2109 = vmatpush1.msra.mxu0 0.0
    %2110 = vmatprep.subr.mxu0 0.0
    %2111 = vmatpush1.msra.mxu0 0.0
    %2112 = vmatprep.subr.mxu0 0.0
    %2113 = vmatpush1.msra.mxu0 0.0
    %2114 = vmatprep.subr.mxu0 0.0
    %2115 = vmatpush1.msra.mxu0 0.0
    %2116 = vmatprep.subr.mxu0 0.0
    %2117 = vmatpush1.msra.mxu0 0.0
    %2118 = vmatprep.subr.mxu0 0.0
    %2119 = vmatpush1.msra.mxu0 0.0
    %2120 = vmatprep.subr.mxu0 0.0
    %2121 = vmatpush1.msra.mxu0 0.0
    %2122 = vmatprep.subr.mxu0 0.0
    %2123 = vmatpush1.msra.mxu0 0.0
    %2124 = vmatprep.subr.mxu0 0.0
    %2125 = vmatpush1.msra.mxu0 0.0
    %2126 = vmatprep.subr.mxu0 0.0
    %2127 = vmatpush1.msra.mxu0 0.0
    %2128 = vmatprep.subr.mxu0 0.0
    %2129 = vmatpush1.msra.mxu0 0.0
    %2130 = vmatprep.subr.mxu0 0.0
    %2131 = vmatpush1.msra.mxu0 0.0
    %2132 = vmatprep.subr.mxu0 0.0
    %2133 = vmatpush1.msra.mxu0 0.0
    %2134 = vmatprep.subr.mxu0 0.0
    %2135 = vmatpush1.msra.mxu0 0.0
    %2136 = vmatprep.subr.mxu0 0.0
    %2137 = vmatpush1.msra.mxu0 0.0
    %2138 = vmatprep.subr.mxu0 0.0
    %2139 = vmatpush1.msra.mxu0 0.0
    %2140 = vmatprep.subr.mxu0 0.0
    %2141 = vmatpush1.msra.mxu0 0.0
    %2142 = vmatprep.subr.mxu0 0.0
    %2143 = vmatpush1.msra.mxu0 0.0
    %2144 = vmatprep.subr.mxu0 0.0
    %2145 = vmatpush1.msra.mxu0 0.0
    %2146 = vmatprep.subr.mxu0 0.0
    %2147 = vmatpush1.msra.mxu0 0.0
    %2148 = vmatprep.subr.mxu0 0.0
    %2149 = vmatpush1.msra.mxu0 0.0
    %2150 = vmatprep.subr.mxu0 0.0
    %2151 = vmatpush1.msra.mxu0 0.0
    %2152 = vmatprep.subr.mxu0 0.0
    %2153 = vmatpush1.msra.mxu0 0.0
    %2154 = vmatprep.subr.mxu0 0.0
    %2155 = vmatpush1.msra.mxu0 0.0
    %2156 = vmatprep.subr.mxu0 0.0
    %2157 = vmatpush1.msra.mxu0 0.0
    %2158 = vmatprep.subr.mxu0 0.0
    %2159 = vmatpush1.msra.mxu0 0.0
    %2160 = vmatprep.subr.mxu0 0.0
    %2161 = vmatpush1.msra.mxu0 0.0
    %2162 = vmatprep.subr.mxu0 0.0
    %2163 = vmatpush1.msra.mxu0 0.0
    %2164 = vmatprep.subr.mxu0 0.0
    %2165 = vmatpush1.msra.mxu0 0.0
    %2166 = vmatprep.mubr.f32.mxu0 0.0
    %2167 = vmatmul.mubr.f32.gmra.mrb[0].mxu0 %v2100
    %v2168 = vpop.f32.mrb[0].mxu0
    %v2169 = vadd.f32 0.0, %v2168
    %v2170 = vpop.f32.mrb[0].mxu0
    %2171 = vdwg.mxu0
    %v2173 = vsel %vm192, %v2098, 0
    %2175 = vmatprep.subr.mxu0 0.0
    %2176 = vmatpush1.msra.mxu0 %v1932
    %2177 = vmatprep.subr.mxu0 0.0
    %2178 = vmatpush1.msra.mxu0 0.0
    %2179 = vmatprep.subr.mxu0 0.0
    %2180 = vmatpush1.msra.mxu0 0.0
    %2181 = vmatprep.subr.mxu0 0.0
    %2182 = vmatpush1.msra.mxu0 0.0
    %2183 = vmatprep.subr.mxu0 0.0
    %2184 = vmatpush1.msra.mxu0 0.0
    %2185 = vmatprep.subr.mxu0 0.0
    %2186 = vmatpush1.msra.mxu0 0.0
    %2187 = vmatprep.subr.mxu0 0.0
    %2188 = vmatpush1.msra.mxu0 0.0
    %2189 = vmatprep.subr.mxu0 0.0
    %2190 = vmatpush1.msra.mxu0 0.0
    %2191 = vmatprep.subr.mxu0 0.0
    %2192 = vmatpush1.msra.mxu0 0.0
    %2193 = vmatprep.subr.mxu0 0.0
    %2194 = vmatpush1.msra.mxu0 0.0
    %2195 = vmatprep.subr.mxu0 0.0
    %2196 = vmatpush1.msra.mxu0 0.0
    %2197 = vmatprep.subr.mxu0 0.0
    %2198 = vmatpush1.msra.mxu0 0.0
    %2199 = vmatprep.subr.mxu0 0.0
    %2200 = vmatpush1.msra.mxu0 0.0
    %2201 = vmatprep.subr.mxu0 0.0
    %2202 = vmatpush1.msra.mxu0 0.0
    %2203 = vmatprep.subr.mxu0 0.0
    %2204 = vmatpush1.msra.mxu0 0.0
    %2205 = vmatprep.subr.mxu0 0.0
    %2206 = vmatpush1.msra.mxu0 0.0
    %2207 = vmatprep.subr.mxu0 0.0
    %2208 = vmatpush1.msra.mxu0 0.0
    %2209 = vmatprep.subr.mxu0 0.0
    %2210 = vmatpush1.msra.mxu0 0.0
    %2211 = vmatprep.subr.mxu0 0.0
    %2212 = vmatpush1.msra.mxu0 0.0
    %2213 = vmatprep.subr.mxu0 0.0
    %2214 = vmatpush1.msra.mxu0 0.0
    %2215 = vmatprep.subr.mxu0 0.0
    %2216 = vmatpush1.msra.mxu0 0.0
    %2217 = vmatprep.subr.mxu0 0.0
    %2218 = vmatpush1.msra.mxu0 0.0
    %2219 = vmatprep.subr.mxu0 0.0
    %2220 = vmatpush1.msra.mxu0 0.0
    %2221 = vmatprep.subr.mxu0 0.0
    %2222 = vmatpush1.msra.mxu0 0.0
    %2223 = vmatprep.subr.mxu0 0.0
    %2224 = vmatpush1.msra.mxu0 0.0
    %2225 = vmatprep.subr.mxu0 0.0
    %2226 = vmatpush1.msra.mxu0 0.0
    %2227 = vmatprep.subr.mxu0 0.0
    %2228 = vmatpush1.msra.mxu0 0.0
    %2229 = vmatprep.subr.mxu0 0.0
    %2230 = vmatpush1.msra.mxu0 0.0
    %2231 = vmatprep.subr.mxu0 0.0
    %2232 = vmatpush1.msra.mxu0 0.0
    %2233 = vmatprep.subr.mxu0 0.0
    %2234 = vmatpush1.msra.mxu0 0.0
    %2235 = vmatprep.subr.mxu0 0.0
    %2236 = vmatpush1.msra.mxu0 0.0
    %2237 = vmatprep.subr.mxu0 0.0
    %2238 = vmatpush1.msra.mxu0 0.0
    %2239 = vmatprep.mubr.f32.mxu0 0.0
    %2240 = vmatmul.mubr.f32.gmra.mrb[0].mxu0 %v2173
    %v2241 = vpop.f32.mrb[0].mxu0
    %v2242 = vadd.f32 0.0, %v2241
    %v2243 = vpop.f32.mrb[0].mxu0
    %2244 = vdwg.mxu0
    %v2245 = vld [vmem:[#allocation14] sm:$0xff]
    %v2246 = vld [vmem:[#allocation14 + $0x8] sm:$0xff]
    %v2247 = vld [vmem:[#allocation14 + $0x10] sm:$0xff]
    %v2248 = vld [vmem:[#allocation14 + $0x18] sm:$0xff]
    %v2249 = vld [vmem:[#allocation14 + $0x20] sm:$0xff]
    %v2250 = vld [vmem:[#allocation14 + $0x28] sm:$0xff]
    %v2251 = vld [vmem:[#allocation14 + $0x30] sm:$0xff]
    %v2252 = vld [vmem:[#allocation14 + $0x38] sm:$0xff]
    %v2253 = vld [vmem:[#allocation14 + $0x40] sm:$0xff]
    %v2254 = vld [vmem:[#allocation14 + $0x48] sm:$0xff]
    %v2255 = vld [vmem:[#allocation14 + $0x50] sm:$0xff]
    %v2256 = vld [vmem:[#allocation14 + $0x58] sm:$0xff]
    %v2257 = vld [vmem:[#allocation14 + $0x60] sm:$0xff]
    %v2258 = vld [vmem:[#allocation14 + $0x68] sm:$0xff]
    %v2259 = vld [vmem:[#allocation14 + $0x70] sm:$0xff]
    %v2260 = vld [vmem:[#allocation14 + $0x78] sm:$0xff]
    %v2261 = vld [vmem:[%s11] sm:$0x1]
    %v2263 = vlaneseq
    %v2264 = vshrl.u32 %v2263, 7
    %v2265 = vsub.s32 0, %v2264
    %v2266 = vrot.slane %v2261, %v2265
    %2268 = vmatprep.subr.mxu0 0.0
    %2269 = vmatpush1.msra.mxu0 %v2245
    %2270 = vmatprep.subr.mxu0 0.0
    %2271 = vmatpush1.msra.mxu0 %v2246
    %2272 = vmatprep.subr.mxu0 0.0
    %2273 = vmatpush1.msra.mxu0 %v2247
    %2274 = vmatprep.subr.mxu0 0.0
    %2275 = vmatpush1.msra.mxu0 %v2248
    %2276 = vmatprep.subr.mxu0 0.0
    %2277 = vmatpush1.msra.mxu0 %v2249
    %2278 = vmatprep.subr.mxu0 0.0
    %2279 = vmatpush1.msra.mxu0 %v2250
    %2280 = vmatprep.subr.mxu0 0.0
    %2281 = vmatpush1.msra.mxu0 %v2251
    %2282 = vmatprep.subr.mxu0 0.0
    %2283 = vmatpush1.msra.mxu0 %v2252
    %2284 = vmatprep.subr.mxu0 0.0
    %2285 = vmatpush1.msra.mxu0 %v2253
    %2286 = vmatprep.subr.mxu0 0.0
    %2287 = vmatpush1.msra.mxu0 %v2254
    %2288 = vmatprep.subr.mxu0 0.0
    %2289 = vmatpush1.msra.mxu0 %v2255
    %2290 = vmatprep.subr.mxu0 0.0
    %2291 = vmatpush1.msra.mxu0 %v2256
    %2292 = vmatprep.subr.mxu0 0.0
    %2293 = vmatpush1.msra.mxu0 %v2257
    %2294 = vmatprep.subr.mxu0 0.0
    %2295 = vmatpush1.msra.mxu0 %v2258
    %2296 = vmatprep.subr.mxu0 0.0
    %2297 = vmatpush1.msra.mxu0 %v2259
    %2298 = vmatprep.subr.mxu0 0.0
    %2299 = vmatpush1.msra.mxu0 %v2260
    %2300 = vmatprep.subr.mxu0 0.0
    %2301 = vmatpush1.msra.mxu0 0.0
    %2302 = vmatprep.subr.mxu0 0.0
    %2303 = vmatpush1.msra.mxu0 0.0
    %2304 = vmatprep.subr.mxu0 0.0
    %2305 = vmatpush1.msra.mxu0 0.0
    %2306 = vmatprep.subr.mxu0 0.0
    %2307 = vmatpush1.msra.mxu0 0.0
    %2308 = vmatprep.subr.mxu0 0.0
    %2309 = vmatpush1.msra.mxu0 0.0
    %2310 = vmatprep.subr.mxu0 0.0
    %2311 = vmatpush1.msra.mxu0 0.0
    %2312 = vmatprep.subr.mxu0 0.0
    %2313 = vmatpush1.msra.mxu0 0.0
    %2314 = vmatprep.subr.mxu0 0.0
    %2315 = vmatpush1.msra.mxu0 0.0
    %2316 = vmatprep.subr.mxu0 0.0
    %2317 = vmatpush1.msra.mxu0 0.0
    %2318 = vmatprep.subr.mxu0 0.0
    %2319 = vmatpush1.msra.mxu0 0.0
    %2320 = vmatprep.subr.mxu0 0.0
    %2321 = vmatpush1.msra.mxu0 0.0
    %2322 = vmatprep.subr.mxu0 0.0
    %2323 = vmatpush1.msra.mxu0 0.0
    %2324 = vmatprep.subr.mxu0 0.0
    %2325 = vmatpush1.msra.mxu0 0.0
    %2326 = vmatprep.subr.mxu0 0.0
    %2327 = vmatpush1.msra.mxu0 0.0
    %2328 = vmatprep.subr.mxu0 0.0
    %2329 = vmatpush1.msra.mxu0 0.0
    %2330 = vmatprep.subr.mxu0 0.0
    %2331 = vmatpush1.msra.mxu0 0.0
    %2332 = vmatprep.mubr.f32.mxu0 0.0
    %2333 = vmatmul.mubr.f32.gmra.mrb[0].mxu0 %v2169
    %v2334 = vpop.f32.mrb[0].mxu0
    %v2335 = vadd.f32 %v2266, %v2334
    %v2336 = vpop.f32.mrb[0].mxu0
    %2337 = vmatprep.mubr.f32.mxu0 0.0
    %2338 = vmatmul.mubr.f32.gmra.mrb[0].mxu0 %v2242
    %v2339 = vpop.f32.mrb[0].mxu0
    %v2340 = vadd.f32 %v2266, %v2339
    %v2341 = vpop.f32.mrb[0].mxu0
    %2342 = vdwg.mxu0
    %v2343 = vmax.f32 %v2335, 0.0
    %v2344 = vmax.f32 %v2340, 0.0
    %v2345 = vld [vmem:[#allocation16] sm:$0xff]
    %v2346 = vld [vmem:[#allocation16 + $0x8] sm:$0xff]
    %v2347 = vld [vmem:[#allocation16 + $0x10] sm:$0xff]
    %v2348 = vld [vmem:[#allocation16 + $0x18] sm:$0xff]
    %v2349 = vld [vmem:[#allocation16 + $0x20] sm:$0xff]
    %v2350 = vld [vmem:[#allocation16 + $0x28] sm:$0xff]
    %v2351 = vld [vmem:[#allocation16 + $0x30] sm:$0xff]
    %v2352 = vld [vmem:[#allocation16 + $0x38] sm:$0xff]
    %v2353 = vld [vmem:[#allocation16 + $0x40] sm:$0xff]
    %v2354 = vld [vmem:[#allocation16 + $0x48] sm:$0xff]
    %v2355 = vld [vmem:[#allocation16 + $0x50] sm:$0xff]
    %v2356 = vld [vmem:[#allocation16 + $0x58] sm:$0xff]
    %v2357 = vld [vmem:[#allocation16 + $0x60] sm:$0xff]
    %v2358 = vld [vmem:[#allocation16 + $0x68] sm:$0xff]
    %v2359 = vld [vmem:[#allocation16 + $0x70] sm:$0xff]
    %v2360 = vld [vmem:[#allocation16 + $0x78] sm:$0xff]
    %v2361 = vld [vmem:[%s13] sm:$0x1]
    %v2363 = vlaneseq
    %v2364 = vshrl.u32 %v2363, 7
    %v2365 = vsub.s32 0, %v2364
    %v2366 = vrot.slane %v2361, %v2365
    %2368 = vmatprep.subr.mxu0 0.0
    %2369 = vmatpush1.msra.mxu0 %v2345
    %2370 = vmatprep.subr.mxu0 0.0
    %2371 = vmatpush1.msra.mxu0 %v2346
    %2372 = vmatprep.subr.mxu0 0.0
    %2373 = vmatpush1.msra.mxu0 %v2347
    %2374 = vmatprep.subr.mxu0 0.0
    %2375 = vmatpush1.msra.mxu0 %v2348
    %2376 = vmatprep.subr.mxu0 0.0
    %2377 = vmatpush1.msra.mxu0 %v2349
    %2378 = vmatprep.subr.mxu0 0.0
    %2379 = vmatpush1.msra.mxu0 %v2350
    %2380 = vmatprep.subr.mxu0 0.0
    %2381 = vmatpush1.msra.mxu0 %v2351
    %2382 = vmatprep.subr.mxu0 0.0
    %2383 = vmatpush1.msra.mxu0 %v2352
    %2384 = vmatprep.subr.mxu0 0.0
    %2385 = vmatpush1.msra.mxu0 %v2353
    %2386 = vmatprep.subr.mxu0 0.0
    %2387 = vmatpush1.msra.mxu0 %v2354
    %2388 = vmatprep.subr.mxu0 0.0
    %2389 = vmatpush1.msra.mxu0 %v2355
    %2390 = vmatprep.subr.mxu0 0.0
    %2391 = vmatpush1.msra.mxu0 %v2356
    %2392 = vmatprep.subr.mxu0 0.0
    %2393 = vmatpush1.msra.mxu0 %v2357
    %2394 = vmatprep.subr.mxu0 0.0
    %2395 = vmatpush1.msra.mxu0 %v2358
    %2396 = vmatprep.subr.mxu0 0.0
    %2397 = vmatpush1.msra.mxu0 %v2359
    %2398 = vmatprep.subr.mxu0 0.0
    %2399 = vmatpush1.msra.mxu0 %v2360
    %2400 = vmatprep.subr.mxu0 0.0
    %2401 = vmatpush1.msra.mxu0 0.0
    %2402 = vmatprep.subr.mxu0 0.0
    %2403 = vmatpush1.msra.mxu0 0.0
    %2404 = vmatprep.subr.mxu0 0.0
    %2405 = vmatpush1.msra.mxu0 0.0
    %2406 = vmatprep.subr.mxu0 0.0
    %2407 = vmatpush1.msra.mxu0 0.0
    %2408 = vmatprep.subr.mxu0 0.0
    %2409 = vmatpush1.msra.mxu0 0.0
    %2410 = vmatprep.subr.mxu0 0.0
    %2411 = vmatpush1.msra.mxu0 0.0
    %2412 = vmatprep.subr.mxu0 0.0
    %2413 = vmatpush1.msra.mxu0 0.0
    %2414 = vmatprep.subr.mxu0 0.0
    %2415 = vmatpush1.msra.mxu0 0.0
    %2416 = vmatprep.subr.mxu0 0.0
    %2417 = vmatpush1.msra.mxu0 0.0
    %2418 = vmatprep.subr.mxu0 0.0
    %2419 = vmatpush1.msra.mxu0 0.0
    %2420 = vmatprep.subr.mxu0 0.0
    %2421 = vmatpush1.msra.mxu0 0.0
    %2422 = vmatprep.subr.mxu0 0.0
    %2423 = vmatpush1.msra.mxu0 0.0
    %2424 = vmatprep.subr.mxu0 0.0
    %2425 = vmatpush1.msra.mxu0 0.0
    %2426 = vmatprep.subr.mxu0 0.0
    %2427 = vmatpush1.msra.mxu0 0.0
    %2428 = vmatprep.subr.mxu0 0.0
    %2429 = vmatpush1.msra.mxu0 0.0
    %2430 = vmatprep.subr.mxu0 0.0
    %2431 = vmatpush1.msra.mxu0 0.0
    %2432 = vmatprep.mubr.f32.mxu0 0.0
    %2433 = vmatmul.mubr.f32.gmra.mrb[0].mxu0 %v2343
    %v2434 = vpop.f32.mrb[0].mxu0
    %v2435 = vadd.f32 %v2366, %v2434
    %v2436 = vpop.f32.mrb[0].mxu0
    %2437 = vmatprep.mubr.f32.mxu0 0.0
    %2438 = vmatmul.mubr.f32.gmra.mrb[0].mxu0 %v2344
    %v2439 = vpop.f32.mrb[0].mxu0
    %v2440 = vadd.f32 %v2366, %v2439
    %v2441 = vpop.f32.mrb[0].mxu0
    %2442 = vdwg.mxu0
    %2443 = vst [vmem:[#allocation17] sm:$0xff] %v2435
    %2444 = vst [vmem:[#allocation17 + $0x8] sm:$0xff] %v2440
    // Predicated region
    $region94: #{tpu_custom_call.1} parent=1 // pred_check
      _
    $region95: #{tpu_custom_call.1} parent=1 // pred_check_branch
      %2446 = sbr.rel (0) target = $region97
    $region96: #{tpu_custom_call.1} parent=1 // pred_region
      %s2448 = ssub.s32 256, 256
      %2449 = vsyncadd [#allocation4], %s2448
      %s2450 = sshll.u32 [#allocation17], 4
      %s2451 = int_to_ptr.vmem [resolvable:$true] %s2450
      %2456 = dma.vmem_to_hbm [thread:$0]  %s2451, 256, %s14, [#allocation4], 128, 128, 8
    $region97: #{tpu_custom_call.1} parent=1 // pred_fallthru
      _
    // Predicated region
    $region98: #{tpu_custom_call.1} parent=1 // pred_check
      _
    $region99: #{tpu_custom_call.1} parent=1 // pred_check_branch
      %2458 = sbr.rel (0) target = $region101
    $region100: #{tpu_custom_call.1} parent=1 // pred_region
      %2459 = dma.done [#allocation4], 256
    $region101: #{tpu_custom_call.1} parent=1 // pred_fallthru
      _
    %2460 = vsyncpa [#allocation3], 1
    %2461 = vsyncpa [#allocation6], 1
    %2462 = vsyncpa [#allocation9], 1
    %2463 = vsyncpa [#allocation12], 1
    %2464 = vsyncpa [#allocation15], 1
    %2465 = vsyncpa [#allocation4], 1

</llo_original>
